<compile_context>
chip_gen: v7x
topology: tpu7x:2x2x1
jax: 0.10.0
libtpu: 0.0.40
codegen_flags: <defaults>
</compile_context>

<pallas_src>
import jax
import jax.numpy as jnp
import numpy as np
from jax import lax
from jax.experimental import pallas as pl
from jax.experimental.pallas import tpu as pltpu

VOCAB = 50      # num_words
EMBED = 32      # embed_dim
HIDDEN = 128    # nn.LSTM hidden size
SEQ = 8         # sequence length
BATCH = 2       # batch size


def bilstm_kernel(gx_ref,     # (T, Bp, 4H) f32  row-packed input gates, order [i|f|o|g]
                  whh_ref,    # (2H, 4H) bf16    stacked recurrent weights [W_f ; W_b]
                  whead_ref,  # (Bp, 2H) f32     per-row head weights [w_avg | w_max]
                  out_ref):   # (Bp, 1) f32      per-row partial logits (fwd rows / bwd rows)
    T, Bp, G = gx_ref.shape
    H = G // 4
    half = Bp // 2

    # Direction mask (built once, outside the loop): forward rows keep state
    # columns [:H], backward rows keep columns [H:].
    row = lax.broadcasted_iota(jnp.int32, (Bp, 2 * H), 0)
    col = lax.broadcasted_iota(jnp.int32, (Bp, 2 * H), 1)
    dir_mask = ((row < half) == (col < H)).astype(jnp.float32)

    def step(t, carry):
        hp, c, s, m = carry
        # Single (Bp,2H)@(2H,4H) bf16 MXU matmul serves both directions
        # (row packing selects W_f / W_b per row); f32 accumulation.
        gates = gx_ref[t] + jnp.dot(hp.astype(jnp.bfloat16), whh_ref[...],
                                    preferred_element_type=jnp.float32)   # (Bp, 4H)
        sig = jax.nn.sigmoid(gates[:, :3 * H])     # one EUP slab for [i | f | o]
        g = jnp.tanh(gates[:, 3 * H:])             # one EUP slab for g
        i_g = sig[:, :H]
        f_g = sig[:, H:2 * H]
        o_g = sig[:, 2 * H:]
        c_new = f_g * c + i_g * g                  # (Bp, H) f32
        h_new = o_g * jnp.tanh(c_new)              # (Bp, H) f32
        # Re-pack state: fwd rows -> [h|0], bwd rows -> [0|h]  (~2 vregs of VPU work)
        hp_new = jnp.concatenate([h_new, h_new], axis=-1) * dir_mask
        return hp_new, c_new, s + h_new, jnp.maximum(m, h_new)

    zh = jnp.zeros((Bp, H), jnp.float32)
    init = (jnp.zeros((Bp, 2 * H), jnp.float32), zh, zh,
            jnp.full((Bp, H), -jnp.inf, jnp.float32))
    _, _, ssum, smax = lax.fori_loop(0, T, step, init, unroll=True)

    # Per-row contribution to the Linear(512,1) head: VPU multiply + lane reduce
    # (N=1, so no MXU pass).  fwd/bwd halves are combined in the wrapper.
    feat = jnp.concatenate([ssum * jnp.float32(1.0 / T), smax], axis=-1)     # (Bp, 2H)
    out_ref[...] = jnp.sum(feat * whead_ref[...], axis=-1, keepdims=True)    # (Bp, 1)


def _pad_half(batch):
    """Rows per direction after padding (>=4 so Bp=2*half fills 8 sublanes)."""
    return max(4, ((batch + 3) // 4) * 4)


def _perm(w):
    """Permute last-axis gate columns: PyTorch [i,f,g,o] -> kernel [i,f,o,g]."""
    H = HIDDEN
    return jnp.concatenate([w[..., :H], w[..., H:2 * H],
                            w[..., 3 * H:], w[..., 2 * H:3 * H]], axis=-1)


def prepare_params(params, batch):
    """One-time parameter prep, hoisted out of the per-call forward path."""
    H = HIDDEN
    half = _pad_half(batch)

    # Fused input-projection weight/bias for both directions: (E, 8H) / (1, 8H).
    wih = jnp.concatenate([_perm(params["wih_f"]), _perm(params["wih_b"])], axis=1)
    bih = jnp.concatenate([_perm(params["b_f"]), _perm(params["b_b"])], axis=1)

    # Zero-free stacked recurrent weights (2H, 4H), stored bf16 for the MXU.
    whh = jnp.concatenate([_perm(params["whh_f"]), _perm(params["whh_b"])], axis=0)
    whh = whh.astype(jnp.bfloat16)

    # Per-row output-head weights: forward rows use (w_avg_f | w_max_f),
    # backward rows use (w_avg_b | w_max_b).  feat layout is [avg_f,avg_b,max_f,max_b].
    w = params["w_out"][:, 0]                                   # (4H,)
    w_fwd = jnp.concatenate([w[:H], w[2 * H:3 * H]])            # (2H,)
    w_bwd = jnp.concatenate([w[H:2 * H], w[3 * H:]])            # (2H,)
    w_head = jnp.concatenate([jnp.broadcast_to(w_fwd, (half, 2 * H)),
                              jnp.broadcast_to(w_bwd, (half, 2 * H))], axis=0)

    return {"wih": wih, "bih": bih, "whh": whh,
            "w_head": w_head, "b_out": params["b_out"]}


@jax.jit
def lstm_forward(tokens, embedding, prepared):
    """tokens: (B, T) int32 -> (B, 1) float32."""
    B, T = tokens.shape
    H = HIDDEN
    G = 4 * H
    half = _pad_half(B)
    Bp = 2 * half

    # XLA glue: embedding lookup + ONE fused input projection for both directions.
    x = jnp.take(embedding, tokens, axis=0).astype(jnp.float32)          # (B, T, E)
    x = jnp.transpose(x, (1, 0, 2))                                      # (T, B, E)
    gboth = jnp.einsum('tbe,eg->tbg', x, prepared["wih"]) + prepared["bih"]  # (T, B, 8H)

    # Row-pack: forward sequences in rows [0, half), backward (time-reversed,
    # valid because avg/max pooling is order-invariant) in rows [half, Bp).
    pad = jnp.zeros((T, half - B, G), jnp.float32)
    gx = jnp.concatenate([gboth[:, :, :G], pad, gboth[::-1, :, G:], pad], axis=1)

    vmem = pl.BlockSpec(memory_space=pltpu.MemorySpace.VMEM)
    partial = pl.pallas_call(
        bilstm_kernel,
        out_shape=jax.ShapeDtypeStruct((Bp, 1), jnp.float32),
        in_specs=[vmem, vmem, vmem],
        out_specs=vmem,
    )(gx, prepared["whh"], prepared["w_head"])

    # Combine forward/backward row halves + bias (8 floats; negligible epilogue).
    return partial[:B] + partial[half:half + B] + prepared["b_out"]


def ref_forward(tokens, embedding, params):
    """Pure-JAX f32 reference mirroring torch semantics (for validation)."""
    x = jnp.take(embedding, tokens, axis=0)          # (B, T, E)
    x_tm = jnp.transpose(x, (1, 0, 2))               # (T, B, E)
    B = tokens.shape[0]
    H = HIDDEN

    def run_dir(x_seq, wih, whh, b):
        def scan_fn(carry, x_t):
            h, c = carry
            gates = x_t @ wih + h @ whh + b
            i = jax.nn.sigmoid(gates[:, :H])
            f = jax.nn.sigmoid(gates[:, H:2 * H])
            g = jnp.tanh(gates[:, 2 * H:3 * H])
            o = jax.nn.sigmoid(gates[:, 3 * H:])
            c = f * c + i * g
            h = o * jnp.tanh(c)
            return (h, c), h
        init = (jnp.zeros((B, H), jnp.float32), jnp.zeros((B, H), jnp.float32))
        _, hs = lax.scan(scan_fn, init, x_seq)
        return hs                                     # (T, B, H)

    h_f = run_dir(x_tm, params["wih_f"], params["whh_f"], params["b_f"])
    h_b = run_dir(x_tm[::-1], params["wih_b"], params["whh_b"], params["b_b"])[::-1]
    h = jnp.concatenate([h_f, h_b], axis=-1)          # (T, B, 2H)
    h = jnp.transpose(h, (1, 0, 2))                   # (B, T, 2H)
    avg = jnp.mean(h, axis=1)
    mx = jnp.max(h, axis=1)
    feat = jnp.concatenate([avg, mx], axis=1)         # (B, 512)
    return feat @ params["w_out"] + params["b_out"]


def init_params(key):
    ks = jax.random.split(key, 10)
    H4 = 4 * HIDDEN
    s = 0.1
    embedding = jax.random.normal(ks[0], (VOCAB, EMBED), jnp.float32)
    params = {
        # forward direction (weights pre-transposed; b = b_ih + b_hh combined)
        "wih_f": s * jax.random.normal(ks[1], (EMBED, H4), jnp.float32),
        "whh_f": s * jax.random.normal(ks[2], (HIDDEN, H4), jnp.float32),
        "b_f":   s * jax.random.normal(ks[3], (1, H4), jnp.float32),
        # reverse direction
        "wih_b": s * jax.random.normal(ks[4], (EMBED, H4), jnp.float32),
        "whh_b": s * jax.random.normal(ks[5], (HIDDEN, H4), jnp.float32),
        "b_b":   s * jax.random.normal(ks[6], (1, H4), jnp.float32),
        # Linear(512 -> 1)
        "w_out": s * jax.random.normal(ks[7], (4 * HIDDEN, 1), jnp.float32),
        "b_out": s * jax.random.normal(ks[8], (1, 1), jnp.float32),
    }
    return embedding, params


if __name__ == "__main__":
    key = jax.random.PRNGKey(0)
    k_tok, k_par = jax.random.split(key)
    embedding, params = init_params(k_par)
    tokens = jax.random.randint(k_tok, (BATCH, SEQ), 0, VOCAB, dtype=jnp.int32)

    prepared = prepare_params(params, BATCH)          # one-time prep (hoisted)

    out = jax.block_until_ready(lstm_forward(tokens, embedding, prepared))
    ref = jax.block_until_ready(ref_forward(tokens, embedding, params))

    # Pure-f32 variant validated at 1e-3; bf16 MXU operands in the 8-step
    # recurrence (f32 accumulation, f32 state) widen the bound slightly.
    np.testing.assert_allclose(np.asarray(out), np.asarray(ref),
                               rtol=5e-3, atol=5e-3)
    assert out.shape == (BATCH, 1)
    print("KERNEL_OK")
</pallas_src>

<mosaic_0001>
module attributes {stable_mosaic.version = 11 : i64} {
  func.func @bilstm_kernel(%arg0: memref<8x8x512xf32, #tpu.memory_space<vmem>>, %arg1: memref<256x512xbf16, #tpu.memory_space<vmem>>, %arg2: memref<8x256xf32, #tpu.memory_space<vmem>>, %arg3: memref<8x1xf32, #tpu.memory_space<vmem>>) attributes {dimension_semantics = [], scalar_prefetch = 0 : i64, scratch_operands = 0 : i64, tpu.core_type = #tpu.core_type<tc>} {
    %0 = tpu.iota {dimensions = array<i32: 0>} : vector<8x256xi32>
    %1 = tpu.iota {dimensions = array<i32: 1>} : vector<8x256xi32>
    %c4_i32 = arith.constant 4 : i32
    %2 = vector.broadcast %c4_i32 : i32 to vector<8x256xi32>
    %3 = arith.cmpi slt, %0, %2 : vector<8x256xi32>
    %c128_i32 = arith.constant 128 : i32
    %4 = vector.broadcast %c128_i32 : i32 to vector<8x256xi32>
    %5 = arith.cmpi slt, %1, %4 : vector<8x256xi32>
    %6 = arith.xori %3, %5 : vector<8x256xi1>
    %cst = arith.constant dense<true> : vector<8x256xi1>
    %7 = arith.xori %6, %cst : vector<8x256xi1>
    %8 = arith.extui %7 : vector<8x256xi1> to vector<8x256xi32>
    %9 = arith.sitofp %8 : vector<8x256xi32> to vector<8x256xf32>
    %cst_0 = arith.constant 0.000000e+00 : f32
    %10 = vector.broadcast %cst_0 : f32 to vector<8x128xf32>
    %cst_1 = arith.constant 0.000000e+00 : f32
    %11 = vector.broadcast %cst_1 : f32 to vector<8x256xf32>
    %cst_2 = arith.constant 0xFF800000 : f32
    %12 = vector.broadcast %cst_2 : f32 to vector<8x128xf32>
    %c0_i32 = arith.constant 0 : i32
    %13 = arith.index_cast %c0_i32 : i32 to index
    %c0 = arith.constant 0 : index
    %c0_3 = arith.constant 0 : index
    %14 = vector.load %arg0[%13, %c0, %c0_3] : memref<8x8x512xf32, #tpu.memory_space<vmem>>, vector<1x8x512xf32>
    %15 = vector.shape_cast %14 : vector<1x8x512xf32> to vector<8x512xf32>
    %16 = arith.truncf %11 : vector<8x256xf32> to vector<8x256xbf16>
    %c0_4 = arith.constant 0 : index
    %c0_5 = arith.constant 0 : index
    %17 = vector.load %arg1[%c0_4, %c0_5] : memref<256x512xbf16, #tpu.memory_space<vmem>>, vector<256x512xbf16>
    %cst_6 = arith.constant dense<0.000000e+00> : vector<8x512xf32>
    %18 = tpu.matmul %16, %17, %cst_6 {dimension_numbers = #tpu.dot_dimension_numbers<[1], [0], [0], [1], [0, 0, 1, 1], [], []>} : vector<8x256xbf16>, vector<256x512xbf16>, vector<8x512xf32> -> vector<8x512xf32>
    %19 = arith.addf %15, %18 : vector<8x512xf32>
    %20 = vector.extract_strided_slice %19 {offsets = [0, 0], sizes = [8, 384], strides = [1, 1]} : vector<8x512xf32> to vector<8x384xf32>
    %21 = arith.negf %20 : vector<8x384xf32>
    %22 = math.exp %21 : vector<8x384xf32>
    %cst_7 = arith.constant 1.000000e+00 : f32
    %23 = vector.broadcast %cst_7 : f32 to vector<8x384xf32>
    %24 = arith.addf %23, %22 : vector<8x384xf32>
    %25 = arith.divf %23, %24 : vector<8x384xf32>
    %26 = vector.extract_strided_slice %19 {offsets = [0, 384], sizes = [8, 128], strides = [1, 1]} : vector<8x512xf32> to vector<8x128xf32>
    %27 = math.tanh %26 : vector<8x128xf32>
    %28 = vector.extract_strided_slice %25 {offsets = [0, 0], sizes = [8, 128], strides = [1, 1]} : vector<8x384xf32> to vector<8x128xf32>
    %29 = vector.extract_strided_slice %25 {offsets = [0, 128], sizes = [8, 128], strides = [1, 1]} : vector<8x384xf32> to vector<8x128xf32>
    %30 = vector.extract_strided_slice %25 {offsets = [0, 256], sizes = [8, 128], strides = [1, 1]} : vector<8x384xf32> to vector<8x128xf32>
    %31 = arith.mulf %29, %10 : vector<8x128xf32>
    %32 = arith.mulf %28, %27 : vector<8x128xf32>
    %33 = arith.addf %31, %32 : vector<8x128xf32>
    %34 = math.tanh %33 : vector<8x128xf32>
    %35 = arith.mulf %30, %34 : vector<8x128xf32>
    %36 = tpu.concatenate %35, %35 in 1 : vector<8x128xf32>, vector<8x128xf32> -> vector<8x256xf32>
    %37 = arith.mulf %36, %9 : vector<8x256xf32>
    %38 = arith.addf %10, %35 : vector<8x128xf32>
    %39 = arith.maximumf %12, %35 : vector<8x128xf32>
    %c1_i32 = arith.constant 1 : i32
    %40 = arith.index_cast %c1_i32 : i32 to index
    %c0_8 = arith.constant 0 : index
    %c0_9 = arith.constant 0 : index
    %41 = vector.load %arg0[%40, %c0_8, %c0_9] : memref<8x8x512xf32, #tpu.memory_space<vmem>>, vector<1x8x512xf32>
    %42 = vector.shape_cast %41 : vector<1x8x512xf32> to vector<8x512xf32>
    %43 = arith.truncf %37 : vector<8x256xf32> to vector<8x256xbf16>
    %c0_10 = arith.constant 0 : index
    %c0_11 = arith.constant 0 : index
    %44 = vector.load %arg1[%c0_10, %c0_11] : memref<256x512xbf16, #tpu.memory_space<vmem>>, vector<256x512xbf16>
    %cst_12 = arith.constant dense<0.000000e+00> : vector<8x512xf32>
    %45 = tpu.matmul %43, %44, %cst_12 {dimension_numbers = #tpu.dot_dimension_numbers<[1], [0], [0], [1], [0, 0, 1, 1], [], []>} : vector<8x256xbf16>, vector<256x512xbf16>, vector<8x512xf32> -> vector<8x512xf32>
    %46 = arith.addf %42, %45 : vector<8x512xf32>
    %47 = vector.extract_strided_slice %46 {offsets = [0, 0], sizes = [8, 384], strides = [1, 1]} : vector<8x512xf32> to vector<8x384xf32>
    %48 = arith.negf %47 : vector<8x384xf32>
    %49 = math.exp %48 : vector<8x384xf32>
    %cst_13 = arith.constant 1.000000e+00 : f32
    %50 = vector.broadcast %cst_13 : f32 to vector<8x384xf32>
    %51 = arith.addf %50, %49 : vector<8x384xf32>
    %52 = arith.divf %50, %51 : vector<8x384xf32>
    %53 = vector.extract_strided_slice %46 {offsets = [0, 384], sizes = [8, 128], strides = [1, 1]} : vector<8x512xf32> to vector<8x128xf32>
    %54 = math.tanh %53 : vector<8x128xf32>
    %55 = vector.extract_strided_slice %52 {offsets = [0, 0], sizes = [8, 128], strides = [1, 1]} : vector<8x384xf32> to vector<8x128xf32>
    %56 = vector.extract_strided_slice %52 {offsets = [0, 128], sizes = [8, 128], strides = [1, 1]} : vector<8x384xf32> to vector<8x128xf32>
    %57 = vector.extract_strided_slice %52 {offsets = [0, 256], sizes = [8, 128], strides = [1, 1]} : vector<8x384xf32> to vector<8x128xf32>
    %58 = arith.mulf %56, %33 : vector<8x128xf32>
    %59 = arith.mulf %55, %54 : vector<8x128xf32>
    %60 = arith.addf %58, %59 : vector<8x128xf32>
    %61 = math.tanh %60 : vector<8x128xf32>
    %62 = arith.mulf %57, %61 : vector<8x128xf32>
    %63 = tpu.concatenate %62, %62 in 1 : vector<8x128xf32>, vector<8x128xf32> -> vector<8x256xf32>
    %64 = arith.mulf %63, %9 : vector<8x256xf32>
    %65 = arith.addf %38, %62 : vector<8x128xf32>
    %66 = arith.maximumf %39, %62 : vector<8x128xf32>
    %c2_i32 = arith.constant 2 : i32
    %67 = arith.index_cast %c2_i32 : i32 to index
    %c0_14 = arith.constant 0 : index
    %c0_15 = arith.constant 0 : index
    %68 = vector.load %arg0[%67, %c0_14, %c0_15] : memref<8x8x512xf32, #tpu.memory_space<vmem>>, vector<1x8x512xf32>
    %69 = vector.shape_cast %68 : vector<1x8x512xf32> to vector<8x512xf32>
    %70 = arith.truncf %64 : vector<8x256xf32> to vector<8x256xbf16>
    %c0_16 = arith.constant 0 : index
    %c0_17 = arith.constant 0 : index
    %71 = vector.load %arg1[%c0_16, %c0_17] : memref<256x512xbf16, #tpu.memory_space<vmem>>, vector<256x512xbf16>
    %cst_18 = arith.constant dense<0.000000e+00> : vector<8x512xf32>
    %72 = tpu.matmul %70, %71, %cst_18 {dimension_numbers = #tpu.dot_dimension_numbers<[1], [0], [0], [1], [0, 0, 1, 1], [], []>} : vector<8x256xbf16>, vector<256x512xbf16>, vector<8x512xf32> -> vector<8x512xf32>
    %73 = arith.addf %69, %72 : vector<8x512xf32>
    %74 = vector.extract_strided_slice %73 {offsets = [0, 0], sizes = [8, 384], strides = [1, 1]} : vector<8x512xf32> to vector<8x384xf32>
    %75 = arith.negf %74 : vector<8x384xf32>
    %76 = math.exp %75 : vector<8x384xf32>
    %cst_19 = arith.constant 1.000000e+00 : f32
    %77 = vector.broadcast %cst_19 : f32 to vector<8x384xf32>
    %78 = arith.addf %77, %76 : vector<8x384xf32>
    %79 = arith.divf %77, %78 : vector<8x384xf32>
    %80 = vector.extract_strided_slice %73 {offsets = [0, 384], sizes = [8, 128], strides = [1, 1]} : vector<8x512xf32> to vector<8x128xf32>
    %81 = math.tanh %80 : vector<8x128xf32>
    %82 = vector.extract_strided_slice %79 {offsets = [0, 0], sizes = [8, 128], strides = [1, 1]} : vector<8x384xf32> to vector<8x128xf32>
    %83 = vector.extract_strided_slice %79 {offsets = [0, 128], sizes = [8, 128], strides = [1, 1]} : vector<8x384xf32> to vector<8x128xf32>
    %84 = vector.extract_strided_slice %79 {offsets = [0, 256], sizes = [8, 128], strides = [1, 1]} : vector<8x384xf32> to vector<8x128xf32>
    %85 = arith.mulf %83, %60 : vector<8x128xf32>
    %86 = arith.mulf %82, %81 : vector<8x128xf32>
    %87 = arith.addf %85, %86 : vector<8x128xf32>
    %88 = math.tanh %87 : vector<8x128xf32>
    %89 = arith.mulf %84, %88 : vector<8x128xf32>
    %90 = tpu.concatenate %89, %89 in 1 : vector<8x128xf32>, vector<8x128xf32> -> vector<8x256xf32>
    %91 = arith.mulf %90, %9 : vector<8x256xf32>
    %92 = arith.addf %65, %89 : vector<8x128xf32>
    %93 = arith.maximumf %66, %89 : vector<8x128xf32>
    %c3_i32 = arith.constant 3 : i32
    %94 = arith.index_cast %c3_i32 : i32 to index
    %c0_20 = arith.constant 0 : index
    %c0_21 = arith.constant 0 : index
    %95 = vector.load %arg0[%94, %c0_20, %c0_21] : memref<8x8x512xf32, #tpu.memory_space<vmem>>, vector<1x8x512xf32>
    %96 = vector.shape_cast %95 : vector<1x8x512xf32> to vector<8x512xf32>
    %97 = arith.truncf %91 : vector<8x256xf32> to vector<8x256xbf16>
    %c0_22 = arith.constant 0 : index
    %c0_23 = arith.constant 0 : index
    %98 = vector.load %arg1[%c0_22, %c0_23] : memref<256x512xbf16, #tpu.memory_space<vmem>>, vector<256x512xbf16>
    %cst_24 = arith.constant dense<0.000000e+00> : vector<8x512xf32>
    %99 = tpu.matmul %97, %98, %cst_24 {dimension_numbers = #tpu.dot_dimension_numbers<[1], [0], [0], [1], [0, 0, 1, 1], [], []>} : vector<8x256xbf16>, vector<256x512xbf16>, vector<8x512xf32> -> vector<8x512xf32>
    %100 = arith.addf %96, %99 : vector<8x512xf32>
    %101 = vector.extract_strided_slice %100 {offsets = [0, 0], sizes = [8, 384], strides = [1, 1]} : vector<8x512xf32> to vector<8x384xf32>
    %102 = arith.negf %101 : vector<8x384xf32>
    %103 = math.exp %102 : vector<8x384xf32>
    %cst_25 = arith.constant 1.000000e+00 : f32
    %104 = vector.broadcast %cst_25 : f32 to vector<8x384xf32>
    %105 = arith.addf %104, %103 : vector<8x384xf32>
    %106 = arith.divf %104, %105 : vector<8x384xf32>
    %107 = vector.extract_strided_slice %100 {offsets = [0, 384], sizes = [8, 128], strides = [1, 1]} : vector<8x512xf32> to vector<8x128xf32>
    %108 = math.tanh %107 : vector<8x128xf32>
    %109 = vector.extract_strided_slice %106 {offsets = [0, 0], sizes = [8, 128], strides = [1, 1]} : vector<8x384xf32> to vector<8x128xf32>
    %110 = vector.extract_strided_slice %106 {offsets = [0, 128], sizes = [8, 128], strides = [1, 1]} : vector<8x384xf32> to vector<8x128xf32>
    %111 = vector.extract_strided_slice %106 {offsets = [0, 256], sizes = [8, 128], strides = [1, 1]} : vector<8x384xf32> to vector<8x128xf32>
    %112 = arith.mulf %110, %87 : vector<8x128xf32>
    %113 = arith.mulf %109, %108 : vector<8x128xf32>
    %114 = arith.addf %112, %113 : vector<8x128xf32>
    %115 = math.tanh %114 : vector<8x128xf32>
    %116 = arith.mulf %111, %115 : vector<8x128xf32>
    %117 = tpu.concatenate %116, %116 in 1 : vector<8x128xf32>, vector<8x128xf32> -> vector<8x256xf32>
    %118 = arith.mulf %117, %9 : vector<8x256xf32>
    %119 = arith.addf %92, %116 : vector<8x128xf32>
    %120 = arith.maximumf %93, %116 : vector<8x128xf32>
    %c4_i32_26 = arith.constant 4 : i32
    %121 = arith.index_cast %c4_i32_26 : i32 to index
    %c0_27 = arith.constant 0 : index
    %c0_28 = arith.constant 0 : index
    %122 = vector.load %arg0[%121, %c0_27, %c0_28] : memref<8x8x512xf32, #tpu.memory_space<vmem>>, vector<1x8x512xf32>
    %123 = vector.shape_cast %122 : vector<1x8x512xf32> to vector<8x512xf32>
    %124 = arith.truncf %118 : vector<8x256xf32> to vector<8x256xbf16>
    %c0_29 = arith.constant 0 : index
    %c0_30 = arith.constant 0 : index
    %125 = vector.load %arg1[%c0_29, %c0_30] : memref<256x512xbf16, #tpu.memory_space<vmem>>, vector<256x512xbf16>
    %cst_31 = arith.constant dense<0.000000e+00> : vector<8x512xf32>
    %126 = tpu.matmul %124, %125, %cst_31 {dimension_numbers = #tpu.dot_dimension_numbers<[1], [0], [0], [1], [0, 0, 1, 1], [], []>} : vector<8x256xbf16>, vector<256x512xbf16>, vector<8x512xf32> -> vector<8x512xf32>
    %127 = arith.addf %123, %126 : vector<8x512xf32>
    %128 = vector.extract_strided_slice %127 {offsets = [0, 0], sizes = [8, 384], strides = [1, 1]} : vector<8x512xf32> to vector<8x384xf32>
    %129 = arith.negf %128 : vector<8x384xf32>
    %130 = math.exp %129 : vector<8x384xf32>
    %cst_32 = arith.constant 1.000000e+00 : f32
    %131 = vector.broadcast %cst_32 : f32 to vector<8x384xf32>
    %132 = arith.addf %131, %130 : vector<8x384xf32>
    %133 = arith.divf %131, %132 : vector<8x384xf32>
    %134 = vector.extract_strided_slice %127 {offsets = [0, 384], sizes = [8, 128], strides = [1, 1]} : vector<8x512xf32> to vector<8x128xf32>
    %135 = math.tanh %134 : vector<8x128xf32>
    %136 = vector.extract_strided_slice %133 {offsets = [0, 0], sizes = [8, 128], strides = [1, 1]} : vector<8x384xf32> to vector<8x128xf32>
    %137 = vector.extract_strided_slice %133 {offsets = [0, 128], sizes = [8, 128], strides = [1, 1]} : vector<8x384xf32> to vector<8x128xf32>
    %138 = vector.extract_strided_slice %133 {offsets = [0, 256], sizes = [8, 128], strides = [1, 1]} : vector<8x384xf32> to vector<8x128xf32>
    %139 = arith.mulf %137, %114 : vector<8x128xf32>
    %140 = arith.mulf %136, %135 : vector<8x128xf32>
    %141 = arith.addf %139, %140 : vector<8x128xf32>
    %142 = math.tanh %141 : vector<8x128xf32>
    %143 = arith.mulf %138, %142 : vector<8x128xf32>
    %144 = tpu.concatenate %143, %143 in 1 : vector<8x128xf32>, vector<8x128xf32> -> vector<8x256xf32>
    %145 = arith.mulf %144, %9 : vector<8x256xf32>
    %146 = arith.addf %119, %143 : vector<8x128xf32>
    %147 = arith.maximumf %120, %143 : vector<8x128xf32>
    %c5_i32 = arith.constant 5 : i32
    %148 = arith.index_cast %c5_i32 : i32 to index
    %c0_33 = arith.constant 0 : index
    %c0_34 = arith.constant 0 : index
    %149 = vector.load %arg0[%148, %c0_33, %c0_34] : memref<8x8x512xf32, #tpu.memory_space<vmem>>, vector<1x8x512xf32>
    %150 = vector.shape_cast %149 : vector<1x8x512xf32> to vector<8x512xf32>
    %151 = arith.truncf %145 : vector<8x256xf32> to vector<8x256xbf16>
    %c0_35 = arith.constant 0 : index
    %c0_36 = arith.constant 0 : index
    %152 = vector.load %arg1[%c0_35, %c0_36] : memref<256x512xbf16, #tpu.memory_space<vmem>>, vector<256x512xbf16>
    %cst_37 = arith.constant dense<0.000000e+00> : vector<8x512xf32>
    %153 = tpu.matmul %151, %152, %cst_37 {dimension_numbers = #tpu.dot_dimension_numbers<[1], [0], [0], [1], [0, 0, 1, 1], [], []>} : vector<8x256xbf16>, vector<256x512xbf16>, vector<8x512xf32> -> vector<8x512xf32>
    %154 = arith.addf %150, %153 : vector<8x512xf32>
    %155 = vector.extract_strided_slice %154 {offsets = [0, 0], sizes = [8, 384], strides = [1, 1]} : vector<8x512xf32> to vector<8x384xf32>
    %156 = arith.negf %155 : vector<8x384xf32>
    %157 = math.exp %156 : vector<8x384xf32>
    %cst_38 = arith.constant 1.000000e+00 : f32
    %158 = vector.broadcast %cst_38 : f32 to vector<8x384xf32>
    %159 = arith.addf %158, %157 : vector<8x384xf32>
    %160 = arith.divf %158, %159 : vector<8x384xf32>
    %161 = vector.extract_strided_slice %154 {offsets = [0, 384], sizes = [8, 128], strides = [1, 1]} : vector<8x512xf32> to vector<8x128xf32>
    %162 = math.tanh %161 : vector<8x128xf32>
    %163 = vector.extract_strided_slice %160 {offsets = [0, 0], sizes = [8, 128], strides = [1, 1]} : vector<8x384xf32> to vector<8x128xf32>
    %164 = vector.extract_strided_slice %160 {offsets = [0, 128], sizes = [8, 128], strides = [1, 1]} : vector<8x384xf32> to vector<8x128xf32>
    %165 = vector.extract_strided_slice %160 {offsets = [0, 256], sizes = [8, 128], strides = [1, 1]} : vector<8x384xf32> to vector<8x128xf32>
    %166 = arith.mulf %164, %141 : vector<8x128xf32>
    %167 = arith.mulf %163, %162 : vector<8x128xf32>
    %168 = arith.addf %166, %167 : vector<8x128xf32>
    %169 = math.tanh %168 : vector<8x128xf32>
    %170 = arith.mulf %165, %169 : vector<8x128xf32>
    %171 = tpu.concatenate %170, %170 in 1 : vector<8x128xf32>, vector<8x128xf32> -> vector<8x256xf32>
    %172 = arith.mulf %171, %9 : vector<8x256xf32>
    %173 = arith.addf %146, %170 : vector<8x128xf32>
    %174 = arith.maximumf %147, %170 : vector<8x128xf32>
    %c6_i32 = arith.constant 6 : i32
    %175 = arith.index_cast %c6_i32 : i32 to index
    %c0_39 = arith.constant 0 : index
    %c0_40 = arith.constant 0 : index
    %176 = vector.load %arg0[%175, %c0_39, %c0_40] : memref<8x8x512xf32, #tpu.memory_space<vmem>>, vector<1x8x512xf32>
    %177 = vector.shape_cast %176 : vector<1x8x512xf32> to vector<8x512xf32>
    %178 = arith.truncf %172 : vector<8x256xf32> to vector<8x256xbf16>
    %c0_41 = arith.constant 0 : index
    %c0_42 = arith.constant 0 : index
    %179 = vector.load %arg1[%c0_41, %c0_42] : memref<256x512xbf16, #tpu.memory_space<vmem>>, vector<256x512xbf16>
    %cst_43 = arith.constant dense<0.000000e+00> : vector<8x512xf32>
    %180 = tpu.matmul %178, %179, %cst_43 {dimension_numbers = #tpu.dot_dimension_numbers<[1], [0], [0], [1], [0, 0, 1, 1], [], []>} : vector<8x256xbf16>, vector<256x512xbf16>, vector<8x512xf32> -> vector<8x512xf32>
    %181 = arith.addf %177, %180 : vector<8x512xf32>
    %182 = vector.extract_strided_slice %181 {offsets = [0, 0], sizes = [8, 384], strides = [1, 1]} : vector<8x512xf32> to vector<8x384xf32>
    %183 = arith.negf %182 : vector<8x384xf32>
    %184 = math.exp %183 : vector<8x384xf32>
    %cst_44 = arith.constant 1.000000e+00 : f32
    %185 = vector.broadcast %cst_44 : f32 to vector<8x384xf32>
    %186 = arith.addf %185, %184 : vector<8x384xf32>
    %187 = arith.divf %185, %186 : vector<8x384xf32>
    %188 = vector.extract_strided_slice %181 {offsets = [0, 384], sizes = [8, 128], strides = [1, 1]} : vector<8x512xf32> to vector<8x128xf32>
    %189 = math.tanh %188 : vector<8x128xf32>
    %190 = vector.extract_strided_slice %187 {offsets = [0, 0], sizes = [8, 128], strides = [1, 1]} : vector<8x384xf32> to vector<8x128xf32>
    %191 = vector.extract_strided_slice %187 {offsets = [0, 128], sizes = [8, 128], strides = [1, 1]} : vector<8x384xf32> to vector<8x128xf32>
    %192 = vector.extract_strided_slice %187 {offsets = [0, 256], sizes = [8, 128], strides = [1, 1]} : vector<8x384xf32> to vector<8x128xf32>
    %193 = arith.mulf %191, %168 : vector<8x128xf32>
    %194 = arith.mulf %190, %189 : vector<8x128xf32>
    %195 = arith.addf %193, %194 : vector<8x128xf32>
    %196 = math.tanh %195 : vector<8x128xf32>
    %197 = arith.mulf %192, %196 : vector<8x128xf32>
    %198 = tpu.concatenate %197, %197 in 1 : vector<8x128xf32>, vector<8x128xf32> -> vector<8x256xf32>
    %199 = arith.mulf %198, %9 : vector<8x256xf32>
    %200 = arith.addf %173, %197 : vector<8x128xf32>
    %201 = arith.maximumf %174, %197 : vector<8x128xf32>
    %c7_i32 = arith.constant 7 : i32
    %202 = arith.index_cast %c7_i32 : i32 to index
    %c0_45 = arith.constant 0 : index
    %c0_46 = arith.constant 0 : index
    %203 = vector.load %arg0[%202, %c0_45, %c0_46] : memref<8x8x512xf32, #tpu.memory_space<vmem>>, vector<1x8x512xf32>
    %204 = vector.shape_cast %203 : vector<1x8x512xf32> to vector<8x512xf32>
    %205 = arith.truncf %199 : vector<8x256xf32> to vector<8x256xbf16>
    %c0_47 = arith.constant 0 : index
    %c0_48 = arith.constant 0 : index
    %206 = vector.load %arg1[%c0_47, %c0_48] : memref<256x512xbf16, #tpu.memory_space<vmem>>, vector<256x512xbf16>
    %cst_49 = arith.constant dense<0.000000e+00> : vector<8x512xf32>
    %207 = tpu.matmul %205, %206, %cst_49 {dimension_numbers = #tpu.dot_dimension_numbers<[1], [0], [0], [1], [0, 0, 1, 1], [], []>} : vector<8x256xbf16>, vector<256x512xbf16>, vector<8x512xf32> -> vector<8x512xf32>
    %208 = arith.addf %204, %207 : vector<8x512xf32>
    %209 = vector.extract_strided_slice %208 {offsets = [0, 0], sizes = [8, 384], strides = [1, 1]} : vector<8x512xf32> to vector<8x384xf32>
    %210 = arith.negf %209 : vector<8x384xf32>
    %211 = math.exp %210 : vector<8x384xf32>
    %cst_50 = arith.constant 1.000000e+00 : f32
    %212 = vector.broadcast %cst_50 : f32 to vector<8x384xf32>
    %213 = arith.addf %212, %211 : vector<8x384xf32>
    %214 = arith.divf %212, %213 : vector<8x384xf32>
    %215 = vector.extract_strided_slice %208 {offsets = [0, 384], sizes = [8, 128], strides = [1, 1]} : vector<8x512xf32> to vector<8x128xf32>
    %216 = math.tanh %215 : vector<8x128xf32>
    %217 = vector.extract_strided_slice %214 {offsets = [0, 0], sizes = [8, 128], strides = [1, 1]} : vector<8x384xf32> to vector<8x128xf32>
    %218 = vector.extract_strided_slice %214 {offsets = [0, 128], sizes = [8, 128], strides = [1, 1]} : vector<8x384xf32> to vector<8x128xf32>
    %219 = vector.extract_strided_slice %214 {offsets = [0, 256], sizes = [8, 128], strides = [1, 1]} : vector<8x384xf32> to vector<8x128xf32>
    %220 = arith.mulf %218, %195 : vector<8x128xf32>
    %221 = arith.mulf %217, %216 : vector<8x128xf32>
    %222 = arith.addf %220, %221 : vector<8x128xf32>
    %223 = math.tanh %222 : vector<8x128xf32>
    %224 = arith.mulf %219, %223 : vector<8x128xf32>
    %225 = tpu.concatenate %224, %224 in 1 : vector<8x128xf32>, vector<8x128xf32> -> vector<8x256xf32>
    %226 = arith.mulf %225, %9 : vector<8x256xf32>
    %227 = arith.addf %200, %224 : vector<8x128xf32>
    %228 = arith.maximumf %201, %224 : vector<8x128xf32>
    %c8_i32 = arith.constant 8 : i32
    %cst_51 = arith.constant 1.250000e-01 : f32
    %229 = vector.broadcast %cst_51 : f32 to vector<8x128xf32>
    %230 = arith.mulf %227, %229 : vector<8x128xf32>
    %231 = tpu.concatenate %230, %228 in 1 : vector<8x128xf32>, vector<8x128xf32> -> vector<8x256xf32>
    %c0_52 = arith.constant 0 : index
    %c0_53 = arith.constant 0 : index
    %232 = vector.load %arg2[%c0_52, %c0_53] : memref<8x256xf32, #tpu.memory_space<vmem>>, vector<8x256xf32>
    %233 = arith.mulf %231, %232 : vector<8x256xf32>
    %cst_54 = arith.constant dense<0.000000e+00> : vector<8xf32>
    %234 = vector.multi_reduction <add>, %233, %cst_54 [1] : vector<8x256xf32> to vector<8xf32>
    %235 = vector.shape_cast %234 : vector<8xf32> to vector<8x1xf32>
    %c0_55 = arith.constant 0 : index
    %c0_56 = arith.constant 0 : index
    %236 = vector.load %arg3[%c0_55, %c0_56] : memref<8x1xf32, #tpu.memory_space<vmem>>, vector<8x1xf32>
    tpu.vector_store %arg3[%c0_55, %c0_56], %235 {strides = array<i32>} : memref<8x1xf32, #tpu.memory_space<vmem>>, vector<8x1xf32>,
    return
  }
}

</mosaic_0001>

<llo_original>
// kernel: lstm_forward.1
$region0: #{lstm_forward.1}
  #allocation0 [shape = 'u32[]', space=smem, size = 0x4, offset = 0x4, fixed_abs, tag = 'smem constant byte address 0x4 - core index']
  #allocation1 [shape = 'u32[144,128]{1,0:T(1,128)}', space=vmem, size = 0x12000, scoped, tag = 'internal scratch']
  %s0 = inlined_call_operand.vmem [shape: f32[8,8,512], index: 0, kind: input, shape index: {}]
  %s1 = inlined_call_operand.vmem [shape: bf16[256,512], index: 1, kind: input, shape index: {}]
  %s2 = inlined_call_operand.vmem [shape: f32[8,256], index: 2, kind: input, shape index: {}]
  %s3 = inlined_call_operand.vmem [shape: f32[8,1], index: 3, kind: output, shape index: {}]
  %s4 = sld [smem:[#allocation0]]
  $region22: #{lstm_forward.1} parent=0
    _
  %s6 = ssub.s32 1, %s4
  %s7 = scalar_select 0, %s6, %s4
  // Predicated region
  $region2: #{lstm_forward.1} parent=0 // pred_check
    _
  $region3: #{lstm_forward.1} parent=0 // pred_check_branch
    %9 = sbr.rel (0) target = $region5
  $region4: #{lstm_forward.1} parent=0 // pred_region
    _
  $region5: #{lstm_forward.1} parent=0 // pred_fallthru
    _
  // Predicated region
  $region6: #{lstm_forward.1} parent=0 // pred_check
    _
  $region7: #{lstm_forward.1} parent=0 // pred_check_branch
    %11 = sbr.rel (0) target = $region9
  $region8: #{lstm_forward.1} parent=0 // pred_region
    _
  $region9: #{lstm_forward.1} parent=0 // pred_fallthru
    _
  // Predicated region
  $region10: #{lstm_forward.1} parent=0 // pred_check
    _
  $region11: #{lstm_forward.1} parent=0 // pred_check_branch
    %13 = sbr.rel (0) target = $region13
  $region12: #{lstm_forward.1} parent=0 // pred_region
    _
  $region13: #{lstm_forward.1} parent=0 // pred_fallthru
    _
  %v15 = vlaneseq
  %v16 = vshrl.u32 %v15, 7
  %v17 = vlaneseq
  %v18 = vand.u32 %v17, 127
  %v19 = vadd.s32 %v18, 128
  %vm20 = vcmp.lt.s32.totalorder %v16, 4
  %vm21 = vcmp.lt.s32.totalorder %v18, 128
  %vm22 = vcmp.lt.s32.totalorder %v19, 128
  %vm23 = vmxor %vm20, %vm21
  %vm24 = vmxor %vm20, %vm22
  %vm25 = vmxor %vm23, 1
  %vm26 = vmxor %vm24, 1
  %v27 = vsel %vm25, 1, 0
  %v28 = vsel %vm26, 1, 0
  %v29 = vcvt.s32.f32 %v27
  %v30 = vcvt.s32.f32 %v28
  %v31 = vld [vmem:[%s0] sm:$0xff]
  %v32 = vld [vmem:[%s0 + $0x8] sm:$0xff]
  %v33 = vld [vmem:[%s0 + $0x10] sm:$0xff]
  %v34 = vld [vmem:[%s0 + $0x18] sm:$0xff]
  %v35 = vld [vmem:[%s1] sm:$0xff]
  %v36 = vld [vmem:[%s1 + $0x8] sm:$0xff]
  %v37 = vld [vmem:[%s1 + $0x10] sm:$0xff]
  %v38 = vld [vmem:[%s1 + $0x18] sm:$0xff]
  %v39 = vld [vmem:[%s1 + $0x20] sm:$0xff]
  %v40 = vld [vmem:[%s1 + $0x28] sm:$0xff]
  %v41 = vld [vmem:[%s1 + $0x30] sm:$0xff]
  %v42 = vld [vmem:[%s1 + $0x38] sm:$0xff]
  %v43 = vld [vmem:[%s1 + $0x40] sm:$0xff]
  %v44 = vld [vmem:[%s1 + $0x48] sm:$0xff]
  %v45 = vld [vmem:[%s1 + $0x50] sm:$0xff]
  %v46 = vld [vmem:[%s1 + $0x58] sm:$0xff]
  %v47 = vld [vmem:[%s1 + $0x60] sm:$0xff]
  %v48 = vld [vmem:[%s1 + $0x68] sm:$0xff]
  %v49 = vld [vmem:[%s1 + $0x70] sm:$0xff]
  %v50 = vld [vmem:[%s1 + $0x78] sm:$0xff]
  %v51 = vld [vmem:[%s1 + $0x80] sm:$0xff]
  %v52 = vld [vmem:[%s1 + $0x88] sm:$0xff]
  %v53 = vld [vmem:[%s1 + $0x90] sm:$0xff]
  %v54 = vld [vmem:[%s1 + $0x98] sm:$0xff]
  %v55 = vld [vmem:[%s1 + $0xa0] sm:$0xff]
  %v56 = vld [vmem:[%s1 + $0xa8] sm:$0xff]
  %v57 = vld [vmem:[%s1 + $0xb0] sm:$0xff]
  %v58 = vld [vmem:[%s1 + $0xb8] sm:$0xff]
  %v59 = vld [vmem:[%s1 + $0xc0] sm:$0xff]
  %v60 = vld [vmem:[%s1 + $0xc8] sm:$0xff]
  %v61 = vld [vmem:[%s1 + $0xd0] sm:$0xff]
  %v62 = vld [vmem:[%s1 + $0xd8] sm:$0xff]
  %v63 = vld [vmem:[%s1 + $0xe0] sm:$0xff]
  %v64 = vld [vmem:[%s1 + $0xe8] sm:$0xff]
  %v65 = vld [vmem:[%s1 + $0xf0] sm:$0xff]
  %v66 = vld [vmem:[%s1 + $0xf8] sm:$0xff]
  %v67 = vld [vmem:[%s1 + $0x100] sm:$0xff]
  %v68 = vld [vmem:[%s1 + $0x108] sm:$0xff]
  %v69 = vld [vmem:[%s1 + $0x110] sm:$0xff]
  %v70 = vld [vmem:[%s1 + $0x118] sm:$0xff]
  %v71 = vld [vmem:[%s1 + $0x120] sm:$0xff]
  %v72 = vld [vmem:[%s1 + $0x128] sm:$0xff]
  %v73 = vld [vmem:[%s1 + $0x130] sm:$0xff]
  %v74 = vld [vmem:[%s1 + $0x138] sm:$0xff]
  %v75 = vld [vmem:[%s1 + $0x140] sm:$0xff]
  %v76 = vld [vmem:[%s1 + $0x148] sm:$0xff]
  %v77 = vld [vmem:[%s1 + $0x150] sm:$0xff]
  %v78 = vld [vmem:[%s1 + $0x158] sm:$0xff]
  %v79 = vld [vmem:[%s1 + $0x160] sm:$0xff]
  %v80 = vld [vmem:[%s1 + $0x168] sm:$0xff]
  %v81 = vld [vmem:[%s1 + $0x170] sm:$0xff]
  %v82 = vld [vmem:[%s1 + $0x178] sm:$0xff]
  %v83 = vld [vmem:[%s1 + $0x180] sm:$0xff]
  %v84 = vld [vmem:[%s1 + $0x188] sm:$0xff]
  %v85 = vld [vmem:[%s1 + $0x190] sm:$0xff]
  %v86 = vld [vmem:[%s1 + $0x198] sm:$0xff]
  %v87 = vld [vmem:[%s1 + $0x1a0] sm:$0xff]
  %v88 = vld [vmem:[%s1 + $0x1a8] sm:$0xff]
  %v89 = vld [vmem:[%s1 + $0x1b0] sm:$0xff]
  %v90 = vld [vmem:[%s1 + $0x1b8] sm:$0xff]
  %v91 = vld [vmem:[%s1 + $0x1c0] sm:$0xff]
  %v92 = vld [vmem:[%s1 + $0x1c8] sm:$0xff]
  %v93 = vld [vmem:[%s1 + $0x1d0] sm:$0xff]
  %v94 = vld [vmem:[%s1 + $0x1d8] sm:$0xff]
  %v95 = vld [vmem:[%s1 + $0x1e0] sm:$0xff]
  %v96 = vld [vmem:[%s1 + $0x1e8] sm:$0xff]
  %v97 = vld [vmem:[%s1 + $0x1f0] sm:$0xff]
  %v98 = vld [vmem:[%s1 + $0x1f8] sm:$0xff]
  %v163 = vunpack.c.l.b16 %v35
  %v164 = vunpack.c.h.b16 %v35
  %v165 = vunpack.c.l.b16 %v36
  %v166 = vunpack.c.h.b16 %v36
  %v167 = vunpack.c.l.b16 %v37
  %v168 = vunpack.c.h.b16 %v37
  %v169 = vunpack.c.l.b16 %v38
  %v170 = vunpack.c.h.b16 %v38
  %v171 = vunpack.c.l.b16 %v39
  %v172 = vunpack.c.h.b16 %v39
  %v173 = vunpack.c.l.b16 %v40
  %v174 = vunpack.c.h.b16 %v40
  %v175 = vunpack.c.l.b16 %v41
  %v176 = vunpack.c.h.b16 %v41
  %v177 = vunpack.c.l.b16 %v42
  %v178 = vunpack.c.h.b16 %v42
  %v179 = vunpack.c.l.b16 %v43
  %v180 = vunpack.c.h.b16 %v43
  %v181 = vunpack.c.l.b16 %v44
  %v182 = vunpack.c.h.b16 %v44
  %v183 = vunpack.c.l.b16 %v45
  %v184 = vunpack.c.h.b16 %v45
  %v185 = vunpack.c.l.b16 %v46
  %v186 = vunpack.c.h.b16 %v46
  %v187 = vunpack.c.l.b16 %v47
  %v188 = vunpack.c.h.b16 %v47
  %v189 = vunpack.c.l.b16 %v48
  %v190 = vunpack.c.h.b16 %v48
  %v191 = vunpack.c.l.b16 %v49
  %v192 = vunpack.c.h.b16 %v49
  %v193 = vunpack.c.l.b16 %v50
  %v194 = vunpack.c.h.b16 %v50
  %v195 = vunpack.c.l.b16 %v51
  %v196 = vunpack.c.h.b16 %v51
  %v197 = vunpack.c.l.b16 %v52
  %v198 = vunpack.c.h.b16 %v52
  %v199 = vunpack.c.l.b16 %v53
  %v200 = vunpack.c.h.b16 %v53
  %v201 = vunpack.c.l.b16 %v54
  %v202 = vunpack.c.h.b16 %v54
  %v203 = vunpack.c.l.b16 %v55
  %v204 = vunpack.c.h.b16 %v55
  %v205 = vunpack.c.l.b16 %v56
  %v206 = vunpack.c.h.b16 %v56
  %v207 = vunpack.c.l.b16 %v57
  %v208 = vunpack.c.h.b16 %v57
  %v209 = vunpack.c.l.b16 %v58
  %v210 = vunpack.c.h.b16 %v58
  %v211 = vunpack.c.l.b16 %v59
  %v212 = vunpack.c.h.b16 %v59
  %v213 = vunpack.c.l.b16 %v60
  %v214 = vunpack.c.h.b16 %v60
  %v215 = vunpack.c.l.b16 %v61
  %v216 = vunpack.c.h.b16 %v61
  %v217 = vunpack.c.l.b16 %v62
  %v218 = vunpack.c.h.b16 %v62
  %v219 = vunpack.c.l.b16 %v63
  %v220 = vunpack.c.h.b16 %v63
  %v221 = vunpack.c.l.b16 %v64
  %v222 = vunpack.c.h.b16 %v64
  %v223 = vunpack.c.l.b16 %v65
  %v224 = vunpack.c.h.b16 %v65
  %v225 = vunpack.c.l.b16 %v66
  %v226 = vunpack.c.h.b16 %v66
  %v227 = vunpack.c.l.b16 %v67
  %v228 = vunpack.c.h.b16 %v67
  %v229 = vunpack.c.l.b16 %v68
  %v230 = vunpack.c.h.b16 %v68
  %v231 = vunpack.c.l.b16 %v69
  %v232 = vunpack.c.h.b16 %v69
  %v233 = vunpack.c.l.b16 %v70
  %v234 = vunpack.c.h.b16 %v70
  %v235 = vunpack.c.l.b16 %v71
  %v236 = vunpack.c.h.b16 %v71
  %v237 = vunpack.c.l.b16 %v72
  %v238 = vunpack.c.h.b16 %v72
  %v239 = vunpack.c.l.b16 %v73
  %v240 = vunpack.c.h.b16 %v73
  %v241 = vunpack.c.l.b16 %v74
  %v242 = vunpack.c.h.b16 %v74
  %v243 = vunpack.c.l.b16 %v75
  %v244 = vunpack.c.h.b16 %v75
  %v245 = vunpack.c.l.b16 %v76
  %v246 = vunpack.c.h.b16 %v76
  %v247 = vunpack.c.l.b16 %v77
  %v248 = vunpack.c.h.b16 %v77
  %v249 = vunpack.c.l.b16 %v78
  %v250 = vunpack.c.h.b16 %v78
  %v251 = vunpack.c.l.b16 %v79
  %v252 = vunpack.c.h.b16 %v79
  %v253 = vunpack.c.l.b16 %v80
  %v254 = vunpack.c.h.b16 %v80
  %v255 = vunpack.c.l.b16 %v81
  %v256 = vunpack.c.h.b16 %v81
  %v257 = vunpack.c.l.b16 %v82
  %v258 = vunpack.c.h.b16 %v82
  %v259 = vunpack.c.l.b16 %v83
  %v260 = vunpack.c.h.b16 %v83
  %v261 = vunpack.c.l.b16 %v84
  %v262 = vunpack.c.h.b16 %v84
  %v263 = vunpack.c.l.b16 %v85
  %v264 = vunpack.c.h.b16 %v85
  %v265 = vunpack.c.l.b16 %v86
  %v266 = vunpack.c.h.b16 %v86
  %v267 = vunpack.c.l.b16 %v87
  %v268 = vunpack.c.h.b16 %v87
  %v269 = vunpack.c.l.b16 %v88
  %v270 = vunpack.c.h.b16 %v88
  %v271 = vunpack.c.l.b16 %v89
  %v272 = vunpack.c.h.b16 %v89
  %v273 = vunpack.c.l.b16 %v90
  %v274 = vunpack.c.h.b16 %v90
  %v275 = vunpack.c.l.b16 %v91
  %v276 = vunpack.c.h.b16 %v91
  %v277 = vunpack.c.l.b16 %v92
  %v278 = vunpack.c.h.b16 %v92
  %v279 = vunpack.c.l.b16 %v93
  %v280 = vunpack.c.h.b16 %v93
  %v281 = vunpack.c.l.b16 %v94
  %v282 = vunpack.c.h.b16 %v94
  %v283 = vunpack.c.l.b16 %v95
  %v284 = vunpack.c.h.b16 %v95
  %v285 = vunpack.c.l.b16 %v96
  %v286 = vunpack.c.h.b16 %v96
  %v287 = vunpack.c.l.b16 %v97
  %v288 = vunpack.c.h.b16 %v97
  %v289 = vunpack.c.l.b16 %v98
  %v290 = vunpack.c.h.b16 %v98
  %v291 = vpack.c.b16 %v167, %v163
  %v292 = vpack.c.b16 %v168, %v164
  %v293 = vpack.c.b16 %v169, %v165
  %v294 = vpack.c.b16 %v170, %v166
  %v295 = vpack.c.b16 %v175, %v171
  %v296 = vpack.c.b16 %v176, %v172
  %v297 = vpack.c.b16 %v177, %v173
  %v298 = vpack.c.b16 %v178, %v174
  %v299 = vpack.c.b16 %v183, %v179
  %v300 = vpack.c.b16 %v184, %v180
  %v301 = vpack.c.b16 %v185, %v181
  %v302 = vpack.c.b16 %v186, %v182
  %v303 = vpack.c.b16 %v191, %v187
  %v304 = vpack.c.b16 %v192, %v188
  %v305 = vpack.c.b16 %v193, %v189
  %v306 = vpack.c.b16 %v194, %v190
  %v307 = vpack.c.b16 %v199, %v195
  %v308 = vpack.c.b16 %v200, %v196
  %v309 = vpack.c.b16 %v201, %v197
  %v310 = vpack.c.b16 %v202, %v198
  %v311 = vpack.c.b16 %v207, %v203
  %v312 = vpack.c.b16 %v208, %v204
  %v313 = vpack.c.b16 %v209, %v205
  %v314 = vpack.c.b16 %v210, %v206
  %v315 = vpack.c.b16 %v215, %v211
  %v316 = vpack.c.b16 %v216, %v212
  %v317 = vpack.c.b16 %v217, %v213
  %v318 = vpack.c.b16 %v218, %v214
  %v319 = vpack.c.b16 %v223, %v219
  %v320 = vpack.c.b16 %v224, %v220
  %v321 = vpack.c.b16 %v225, %v221
  %v322 = vpack.c.b16 %v226, %v222
  %v323 = vpack.c.b16 %v231, %v227
  %v324 = vpack.c.b16 %v232, %v228
  %v325 = vpack.c.b16 %v233, %v229
  %v326 = vpack.c.b16 %v234, %v230
  %v327 = vpack.c.b16 %v239, %v235
  %v328 = vpack.c.b16 %v240, %v236
  %v329 = vpack.c.b16 %v241, %v237
  %v330 = vpack.c.b16 %v242, %v238
  %v331 = vpack.c.b16 %v247, %v243
  %v332 = vpack.c.b16 %v248, %v244
  %v333 = vpack.c.b16 %v249, %v245
  %v334 = vpack.c.b16 %v250, %v246
  %v335 = vpack.c.b16 %v255, %v251
  %v336 = vpack.c.b16 %v256, %v252
  %v337 = vpack.c.b16 %v257, %v253
  %v338 = vpack.c.b16 %v258, %v254
  %v339 = vpack.c.b16 %v263, %v259
  %v340 = vpack.c.b16 %v264, %v260
  %v341 = vpack.c.b16 %v265, %v261
  %v342 = vpack.c.b16 %v266, %v262
  %v343 = vpack.c.b16 %v271, %v267
  %v344 = vpack.c.b16 %v272, %v268
  %v345 = vpack.c.b16 %v273, %v269
  %v346 = vpack.c.b16 %v274, %v270
  %v347 = vpack.c.b16 %v279, %v275
  %v348 = vpack.c.b16 %v280, %v276
  %v349 = vpack.c.b16 %v281, %v277
  %v350 = vpack.c.b16 %v282, %v278
  %v351 = vpack.c.b16 %v287, %v283
  %v352 = vpack.c.b16 %v288, %v284
  %v353 = vpack.c.b16 %v289, %v285
  %v354 = vpack.c.b16 %v290, %v286
  %419 = vmatprep.subr.bf16.mxu0 %v292
  %420 = vmatpush1.bf16.msra.mxu0 %v291
  %421 = vmatprep.subr.bf16.mxu0 %v296
  %422 = vmatpush1.bf16.msra.mxu0 %v295
  %423 = vmatprep.subr.bf16.mxu0 %v300
  %424 = vmatpush1.bf16.msra.mxu0 %v299
  %425 = vmatprep.subr.bf16.mxu0 %v304
  %426 = vmatpush1.bf16.msra.mxu0 %v303
  %427 = vmatprep.subr.bf16.mxu0 %v308
  %428 = vmatpush1.bf16.msra.mxu0 %v307
  %429 = vmatprep.subr.bf16.mxu0 %v312
  %430 = vmatpush1.bf16.msra.mxu0 %v311
  %431 = vmatprep.subr.bf16.mxu0 %v316
  %432 = vmatpush1.bf16.msra.mxu0 %v315
  %433 = vmatprep.subr.bf16.mxu0 %v320
  %434 = vmatpush1.bf16.msra.mxu0 %v319
  %435 = vmatprep.subr.bf16.mxu0 %v324
  %436 = vmatpush1.bf16.msra.mxu0 %v323
  %437 = vmatprep.subr.bf16.mxu0 %v328
  %438 = vmatpush1.bf16.msra.mxu0 %v327
  %439 = vmatprep.subr.bf16.mxu0 %v332
  %440 = vmatpush1.bf16.msra.mxu0 %v331
  %441 = vmatprep.subr.bf16.mxu0 %v336
  %442 = vmatpush1.bf16.msra.mxu0 %v335
  %443 = vmatprep.subr.bf16.mxu0 %v340
  %444 = vmatpush1.bf16.msra.mxu0 %v339
  %445 = vmatprep.subr.bf16.mxu0 %v344
  %446 = vmatpush1.bf16.msra.mxu0 %v343
  %447 = vmatprep.subr.bf16.mxu0 %v348
  %448 = vmatpush1.bf16.msra.mxu0 %v347
  %449 = vmatprep.subr.bf16.mxu0 %v352
  %450 = vmatpush1.bf16.msra.mxu0 %v351
  %451 = vmatprep.mubr.bf16.mxu0 0
  %452 = vmatmul.mubr.bf16.gmra.mrb[0].mxu0 0
  %v453 = vpop.f32.mrb[0].mxu0
  %v454 = vadd.f32 0.0, %v453
  %v455 = vpop.f32.mrb[0].mxu0
  %v456 = vadd.f32 0.0, %v455
  %v457 = vpop.f32.mrb[0].mxu0
  %v458 = vpop.f32.mrb[0].mxu0
  %459 = vdwg.mxu0
  %460 = vmatprep.subr.bf16.mxu0 %v294
  %461 = vmatpush1.bf16.msra.mxu0 %v293
  %462 = vmatprep.subr.bf16.mxu0 %v298
  %463 = vmatpush1.bf16.msra.mxu0 %v297
  %464 = vmatprep.subr.bf16.mxu0 %v302
  %465 = vmatpush1.bf16.msra.mxu0 %v301
  %466 = vmatprep.subr.bf16.mxu0 %v306
  %467 = vmatpush1.bf16.msra.mxu0 %v305
  %468 = vmatprep.subr.bf16.mxu0 %v310
  %469 = vmatpush1.bf16.msra.mxu0 %v309
  %470 = vmatprep.subr.bf16.mxu0 %v314
  %471 = vmatpush1.bf16.msra.mxu0 %v313
  %472 = vmatprep.subr.bf16.mxu0 %v318
  %473 = vmatpush1.bf16.msra.mxu0 %v317
  %474 = vmatprep.subr.bf16.mxu0 %v322
  %475 = vmatpush1.bf16.msra.mxu0 %v321
  %476 = vmatprep.subr.bf16.mxu0 %v326
  %477 = vmatpush1.bf16.msra.mxu0 %v325
  %478 = vmatprep.subr.bf16.mxu0 %v330
  %479 = vmatpush1.bf16.msra.mxu0 %v329
  %480 = vmatprep.subr.bf16.mxu0 %v334
  %481 = vmatpush1.bf16.msra.mxu0 %v333
  %482 = vmatprep.subr.bf16.mxu0 %v338
  %483 = vmatpush1.bf16.msra.mxu0 %v337
  %484 = vmatprep.subr.bf16.mxu0 %v342
  %485 = vmatpush1.bf16.msra.mxu0 %v341
  %486 = vmatprep.subr.bf16.mxu0 %v346
  %487 = vmatpush1.bf16.msra.mxu0 %v345
  %488 = vmatprep.subr.bf16.mxu0 %v350
  %489 = vmatpush1.bf16.msra.mxu0 %v349
  %490 = vmatprep.subr.bf16.mxu0 %v354
  %491 = vmatpush1.bf16.msra.mxu0 %v353
  %492 = vmatprep.mubr.bf16.mxu0 0
  %493 = vmatmul.mubr.bf16.gmra.mrb[0].mxu0 0
  %v494 = vpop.f32.mrb[0].mxu0
  %v495 = vadd.f32 0.0, %v494
  %v496 = vpop.f32.mrb[0].mxu0
  %v497 = vadd.f32 0.0, %v496
  %v498 = vpop.f32.mrb[0].mxu0
  %v499 = vpop.f32.mrb[0].mxu0
  %500 = vdwg.mxu0
  %v501 = vadd.f32 %v31, %v454
  %v502 = vadd.f32 %v32, %v456
  %v503 = vadd.f32 %v33, %v495
  %v504 = vadd.f32 %v34, %v497
  %v505 = vxor.u32 %v501, 2147483648
  %v506 = vxor.u32 %v502, 2147483648
  %v507 = vxor.u32 %v503, 2147483648
  %v508 = vmul.f32 %v505, 1.442695
  %v509 = vpow.pop %v508
  %v510 = vmul.f32 %v506, 1.442695
  %v511 = vpow.pop %v510
  %v512 = vmul.f32 %v507, 1.442695
  %v513 = vpow.pop %v512
  %v514 = vadd.f32 %v509, 1.0
  %v515 = vadd.f32 %v511, 1.0
  %v516 = vadd.f32 %v513, 1.0
  %v517 = vrcp.pop %v514
  %v518 = vmul.f32 1.0, %v517
  %v519 = vrcp.pop %v515
  %v520 = vmul.f32 1.0, %v519
  %v521 = vrcp.pop %v516
  %v522 = vmul.f32 1.0, %v521
  %v523 = vtanh.pop %v504
  %v524 = vmul.f32 %v520, 0.0
  %v525 = vmul.f32 %v518, %v523
  %v526 = vadd.f32 %v524, %v525
  %v527 = vtanh.pop %v526
  %v528 = vmul.f32 %v522, %v527
  %v529 = vmul.f32 %v528, %v29
  %v530 = vmul.f32 %v528, %v30
  %v531 = vadd.f32 %v528, 0.0
  %s532 = scalar_lea.vmem %s0, 32
  %v533 = vld [vmem:[%s532] sm:$0xff]
  %v534 = vld [vmem:[%s532 + $0x8] sm:$0xff]
  %v535 = vld [vmem:[%s532 + $0x10] sm:$0xff]
  %v536 = vld [vmem:[%s532 + $0x18] sm:$0xff]
  %v537 = vpack.c.bf16 %v529, %v529
  %v538 = vpack.c.bf16 %v530, %v530
  %539 = vmatprep.subr.bf16.mxu0 %v292
  %540 = vmatpush1.bf16.msra.mxu0 %v291
  %541 = vmatprep.subr.bf16.mxu0 %v296
  %542 = vmatpush1.bf16.msra.mxu0 %v295
  %543 = vmatprep.subr.bf16.mxu0 %v300
  %544 = vmatpush1.bf16.msra.mxu0 %v299
  %545 = vmatprep.subr.bf16.mxu0 %v304
  %546 = vmatpush1.bf16.msra.mxu0 %v303
  %547 = vmatprep.subr.bf16.mxu0 %v308
  %548 = vmatpush1.bf16.msra.mxu0 %v307
  %549 = vmatprep.subr.bf16.mxu0 %v312
  %550 = vmatpush1.bf16.msra.mxu0 %v311
  %551 = vmatprep.subr.bf16.mxu0 %v316
  %552 = vmatpush1.bf16.msra.mxu0 %v315
  %553 = vmatprep.subr.bf16.mxu0 %v320
  %554 = vmatpush1.bf16.msra.mxu0 %v319
  %555 = vmatprep.subr.bf16.mxu0 %v324
  %556 = vmatpush1.bf16.msra.mxu0 %v323
  %557 = vmatprep.subr.bf16.mxu0 %v328
  %558 = vmatpush1.bf16.msra.mxu0 %v327
  %559 = vmatprep.subr.bf16.mxu0 %v332
  %560 = vmatpush1.bf16.msra.mxu0 %v331
  %561 = vmatprep.subr.bf16.mxu0 %v336
  %562 = vmatpush1.bf16.msra.mxu0 %v335
  %563 = vmatprep.subr.bf16.mxu0 %v340
  %564 = vmatpush1.bf16.msra.mxu0 %v339
  %565 = vmatprep.subr.bf16.mxu0 %v344
  %566 = vmatpush1.bf16.msra.mxu0 %v343
  %567 = vmatprep.subr.bf16.mxu0 %v348
  %568 = vmatpush1.bf16.msra.mxu0 %v347
  %569 = vmatprep.subr.bf16.mxu0 %v352
  %570 = vmatpush1.bf16.msra.mxu0 %v351
  %571 = vmatprep.mubr.bf16.mxu0 %v538
  %572 = vmatmul.mubr.bf16.gmra.mrb[0].mxu0 %v537
  %v573 = vpop.f32.mrb[0].mxu0
  %v574 = vadd.f32 0.0, %v573
  %v575 = vpop.f32.mrb[0].mxu0
  %v576 = vadd.f32 0.0, %v575
  %v577 = vpop.f32.mrb[0].mxu0
  %v578 = vpop.f32.mrb[0].mxu0
  %579 = vdwg.mxu0
  %580 = vmatprep.subr.bf16.mxu0 %v294
  %581 = vmatpush1.bf16.msra.mxu0 %v293
  %582 = vmatprep.subr.bf16.mxu0 %v298
  %583 = vmatpush1.bf16.msra.mxu0 %v297
  %584 = vmatprep.subr.bf16.mxu0 %v302
  %585 = vmatpush1.bf16.msra.mxu0 %v301
  %586 = vmatprep.subr.bf16.mxu0 %v306
  %587 = vmatpush1.bf16.msra.mxu0 %v305
  %588 = vmatprep.subr.bf16.mxu0 %v310
  %589 = vmatpush1.bf16.msra.mxu0 %v309
  %590 = vmatprep.subr.bf16.mxu0 %v314
  %591 = vmatpush1.bf16.msra.mxu0 %v313
  %592 = vmatprep.subr.bf16.mxu0 %v318
  %593 = vmatpush1.bf16.msra.mxu0 %v317
  %594 = vmatprep.subr.bf16.mxu0 %v322
  %595 = vmatpush1.bf16.msra.mxu0 %v321
  %596 = vmatprep.subr.bf16.mxu0 %v326
  %597 = vmatpush1.bf16.msra.mxu0 %v325
  %598 = vmatprep.subr.bf16.mxu0 %v330
  %599 = vmatpush1.bf16.msra.mxu0 %v329
  %600 = vmatprep.subr.bf16.mxu0 %v334
  %601 = vmatpush1.bf16.msra.mxu0 %v333
  %602 = vmatprep.subr.bf16.mxu0 %v338
  %603 = vmatpush1.bf16.msra.mxu0 %v337
  %604 = vmatprep.subr.bf16.mxu0 %v342
  %605 = vmatpush1.bf16.msra.mxu0 %v341
  %606 = vmatprep.subr.bf16.mxu0 %v346
  %607 = vmatpush1.bf16.msra.mxu0 %v345
  %608 = vmatprep.subr.bf16.mxu0 %v350
  %609 = vmatpush1.bf16.msra.mxu0 %v349
  %610 = vmatprep.subr.bf16.mxu0 %v354
  %611 = vmatpush1.bf16.msra.mxu0 %v353
  %612 = vmatprep.mubr.bf16.mxu0 %v538
  %613 = vmatmul.mubr.bf16.gmra.mrb[0].mxu0 %v537
  %v614 = vpop.f32.mrb[0].mxu0
  %v615 = vadd.f32 0.0, %v614
  %v616 = vpop.f32.mrb[0].mxu0
  %v617 = vadd.f32 0.0, %v616
  %v618 = vpop.f32.mrb[0].mxu0
  %v619 = vpop.f32.mrb[0].mxu0
  %620 = vdwg.mxu0
  %v621 = vadd.f32 %v533, %v574
  %v622 = vadd.f32 %v534, %v576
  %v623 = vadd.f32 %v535, %v615
  %v624 = vadd.f32 %v536, %v617
  %v625 = vxor.u32 %v621, 2147483648
  %v626 = vxor.u32 %v622, 2147483648
  %v627 = vxor.u32 %v623, 2147483648
  %v628 = vmul.f32 %v625, 1.442695
  %v629 = vpow.pop %v628
  %v630 = vmul.f32 %v626, 1.442695
  %v631 = vpow.pop %v630
  %v632 = vmul.f32 %v627, 1.442695
  %v633 = vpow.pop %v632
  %v634 = vadd.f32 %v629, 1.0
  %v635 = vadd.f32 %v631, 1.0
  %v636 = vadd.f32 %v633, 1.0
  %v637 = vrcp.pop %v634
  %v638 = vmul.f32 1.0, %v637
  %v639 = vrcp.pop %v635
  %v640 = vmul.f32 1.0, %v639
  %v641 = vrcp.pop %v636
  %v642 = vmul.f32 1.0, %v641
  %v643 = vtanh.pop %v624
  %v644 = vmul.f32 %v640, %v526
  %v645 = vmul.f32 %v638, %v643
  %v646 = vadd.f32 %v644, %v645
  %v647 = vtanh.pop %v646
  %v648 = vmul.f32 %v642, %v647
  %v649 = vmul.f32 %v648, %v29
  %v650 = vmul.f32 %v648, %v30
  %v651 = vadd.f32 %v531, %v648
  %v652 = vmax.f32 %v528, %v648
  %s653 = scalar_lea.vmem %s0, 64
  %v654 = vld [vmem:[%s653] sm:$0xff]
  %v655 = vld [vmem:[%s653 + $0x8] sm:$0xff]
  %v656 = vld [vmem:[%s653 + $0x10] sm:$0xff]
  %v657 = vld [vmem:[%s653 + $0x18] sm:$0xff]
  %v658 = vpack.c.bf16 %v649, %v649
  %v659 = vpack.c.bf16 %v650, %v650
  %660 = vmatprep.subr.bf16.mxu0 %v292
  %661 = vmatpush1.bf16.msra.mxu0 %v291
  %662 = vmatprep.subr.bf16.mxu0 %v296
  %663 = vmatpush1.bf16.msra.mxu0 %v295
  %664 = vmatprep.subr.bf16.mxu0 %v300
  %665 = vmatpush1.bf16.msra.mxu0 %v299
  %666 = vmatprep.subr.bf16.mxu0 %v304
  %667 = vmatpush1.bf16.msra.mxu0 %v303
  %668 = vmatprep.subr.bf16.mxu0 %v308
  %669 = vmatpush1.bf16.msra.mxu0 %v307
  %670 = vmatprep.subr.bf16.mxu0 %v312
  %671 = vmatpush1.bf16.msra.mxu0 %v311
  %672 = vmatprep.subr.bf16.mxu0 %v316
  %673 = vmatpush1.bf16.msra.mxu0 %v315
  %674 = vmatprep.subr.bf16.mxu0 %v320
  %675 = vmatpush1.bf16.msra.mxu0 %v319
  %676 = vmatprep.subr.bf16.mxu0 %v324
  %677 = vmatpush1.bf16.msra.mxu0 %v323
  %678 = vmatprep.subr.bf16.mxu0 %v328
  %679 = vmatpush1.bf16.msra.mxu0 %v327
  %680 = vmatprep.subr.bf16.mxu0 %v332
  %681 = vmatpush1.bf16.msra.mxu0 %v331
  %682 = vmatprep.subr.bf16.mxu0 %v336
  %683 = vmatpush1.bf16.msra.mxu0 %v335
  %684 = vmatprep.subr.bf16.mxu0 %v340
  %685 = vmatpush1.bf16.msra.mxu0 %v339
  %686 = vmatprep.subr.bf16.mxu0 %v344
  %687 = vmatpush1.bf16.msra.mxu0 %v343
  %688 = vmatprep.subr.bf16.mxu0 %v348
  %689 = vmatpush1.bf16.msra.mxu0 %v347
  %690 = vmatprep.subr.bf16.mxu0 %v352
  %691 = vmatpush1.bf16.msra.mxu0 %v351
  %692 = vmatprep.mubr.bf16.mxu0 %v659
  %693 = vmatmul.mubr.bf16.gmra.mrb[0].mxu0 %v658
  %v694 = vpop.f32.mrb[0].mxu0
  %v695 = vadd.f32 0.0, %v694
  %v696 = vpop.f32.mrb[0].mxu0
  %v697 = vadd.f32 0.0, %v696
  %v698 = vpop.f32.mrb[0].mxu0
  %v699 = vpop.f32.mrb[0].mxu0
  %700 = vdwg.mxu0
  %701 = vmatprep.subr.bf16.mxu0 %v294
  %702 = vmatpush1.bf16.msra.mxu0 %v293
  %703 = vmatprep.subr.bf16.mxu0 %v298
  %704 = vmatpush1.bf16.msra.mxu0 %v297
  %705 = vmatprep.subr.bf16.mxu0 %v302
  %706 = vmatpush1.bf16.msra.mxu0 %v301
  %707 = vmatprep.subr.bf16.mxu0 %v306
  %708 = vmatpush1.bf16.msra.mxu0 %v305
  %709 = vmatprep.subr.bf16.mxu0 %v310
  %710 = vmatpush1.bf16.msra.mxu0 %v309
  %711 = vmatprep.subr.bf16.mxu0 %v314
  %712 = vmatpush1.bf16.msra.mxu0 %v313
  %713 = vmatprep.subr.bf16.mxu0 %v318
  %714 = vmatpush1.bf16.msra.mxu0 %v317
  %715 = vmatprep.subr.bf16.mxu0 %v322
  %716 = vmatpush1.bf16.msra.mxu0 %v321
  %717 = vmatprep.subr.bf16.mxu0 %v326
  %718 = vmatpush1.bf16.msra.mxu0 %v325
  %719 = vmatprep.subr.bf16.mxu0 %v330
  %720 = vmatpush1.bf16.msra.mxu0 %v329
  %721 = vmatprep.subr.bf16.mxu0 %v334
  %722 = vmatpush1.bf16.msra.mxu0 %v333
  %723 = vmatprep.subr.bf16.mxu0 %v338
  %724 = vmatpush1.bf16.msra.mxu0 %v337
  %725 = vmatprep.subr.bf16.mxu0 %v342
  %726 = vmatpush1.bf16.msra.mxu0 %v341
  %727 = vmatprep.subr.bf16.mxu0 %v346
  %728 = vmatpush1.bf16.msra.mxu0 %v345
  %729 = vmatprep.subr.bf16.mxu0 %v350
  %730 = vmatpush1.bf16.msra.mxu0 %v349
  %731 = vmatprep.subr.bf16.mxu0 %v354
  %732 = vmatpush1.bf16.msra.mxu0 %v353
  %733 = vmatprep.mubr.bf16.mxu0 %v659
  %734 = vmatmul.mubr.bf16.gmra.mrb[0].mxu0 %v658
  %v735 = vpop.f32.mrb[0].mxu0
  %v736 = vadd.f32 0.0, %v735
  %v737 = vpop.f32.mrb[0].mxu0
  %v738 = vadd.f32 0.0, %v737
  %v739 = vpop.f32.mrb[0].mxu0
  %v740 = vpop.f32.mrb[0].mxu0
  %741 = vdwg.mxu0
  %v742 = vadd.f32 %v654, %v695
  %v743 = vadd.f32 %v655, %v697
  %v744 = vadd.f32 %v656, %v736
  %v745 = vadd.f32 %v657, %v738
  %v746 = vxor.u32 %v742, 2147483648
  %v747 = vxor.u32 %v743, 2147483648
  %v748 = vxor.u32 %v744, 2147483648
  %v749 = vmul.f32 %v746, 1.442695
  %v750 = vpow.pop %v749
  %v751 = vmul.f32 %v747, 1.442695
  %v752 = vpow.pop %v751
  %v753 = vmul.f32 %v748, 1.442695
  %v754 = vpow.pop %v753
  %v755 = vadd.f32 %v750, 1.0
  %v756 = vadd.f32 %v752, 1.0
  %v757 = vadd.f32 %v754, 1.0
  %v758 = vrcp.pop %v755
  %v759 = vmul.f32 1.0, %v758
  %v760 = vrcp.pop %v756
  %v761 = vmul.f32 1.0, %v760
  %v762 = vrcp.pop %v757
  %v763 = vmul.f32 1.0, %v762
  %v764 = vtanh.pop %v745
  %v765 = vmul.f32 %v761, %v646
  %v766 = vmul.f32 %v759, %v764
  %v767 = vadd.f32 %v765, %v766
  %v768 = vtanh.pop %v767
  %v769 = vmul.f32 %v763, %v768
  %v770 = vmul.f32 %v769, %v29
  %v771 = vmul.f32 %v769, %v30
  %v772 = vadd.f32 %v651, %v769
  %v773 = vmax.f32 %v652, %v769
  %s774 = scalar_lea.vmem %s0, 96
  %v775 = vld [vmem:[%s774] sm:$0xff]
  %v776 = vld [vmem:[%s774 + $0x8] sm:$0xff]
  %v777 = vld [vmem:[%s774 + $0x10] sm:$0xff]
  %v778 = vld [vmem:[%s774 + $0x18] sm:$0xff]
  %v779 = vpack.c.bf16 %v770, %v770
  %v780 = vpack.c.bf16 %v771, %v771
  %781 = vmatprep.subr.bf16.mxu0 %v292
  %782 = vmatpush1.bf16.msra.mxu0 %v291
  %783 = vmatprep.subr.bf16.mxu0 %v296
  %784 = vmatpush1.bf16.msra.mxu0 %v295
  %785 = vmatprep.subr.bf16.mxu0 %v300
  %786 = vmatpush1.bf16.msra.mxu0 %v299
  %787 = vmatprep.subr.bf16.mxu0 %v304
  %788 = vmatpush1.bf16.msra.mxu0 %v303
  %789 = vmatprep.subr.bf16.mxu0 %v308
  %790 = vmatpush1.bf16.msra.mxu0 %v307
  %791 = vmatprep.subr.bf16.mxu0 %v312
  %792 = vmatpush1.bf16.msra.mxu0 %v311
  %793 = vmatprep.subr.bf16.mxu0 %v316
  %794 = vmatpush1.bf16.msra.mxu0 %v315
  %795 = vmatprep.subr.bf16.mxu0 %v320
  %796 = vmatpush1.bf16.msra.mxu0 %v319
  %797 = vmatprep.subr.bf16.mxu0 %v324
  %798 = vmatpush1.bf16.msra.mxu0 %v323
  %799 = vmatprep.subr.bf16.mxu0 %v328
  %800 = vmatpush1.bf16.msra.mxu0 %v327
  %801 = vmatprep.subr.bf16.mxu0 %v332
  %802 = vmatpush1.bf16.msra.mxu0 %v331
  %803 = vmatprep.subr.bf16.mxu0 %v336
  %804 = vmatpush1.bf16.msra.mxu0 %v335
  %805 = vmatprep.subr.bf16.mxu0 %v340
  %806 = vmatpush1.bf16.msra.mxu0 %v339
  %807 = vmatprep.subr.bf16.mxu0 %v344
  %808 = vmatpush1.bf16.msra.mxu0 %v343
  %809 = vmatprep.subr.bf16.mxu0 %v348
  %810 = vmatpush1.bf16.msra.mxu0 %v347
  %811 = vmatprep.subr.bf16.mxu0 %v352
  %812 = vmatpush1.bf16.msra.mxu0 %v351
  %813 = vmatprep.mubr.bf16.mxu0 %v780
  %814 = vmatmul.mubr.bf16.gmra.mrb[0].mxu0 %v779
  %v815 = vpop.f32.mrb[0].mxu0
  %v816 = vadd.f32 0.0, %v815
  %v817 = vpop.f32.mrb[0].mxu0
  %v818 = vadd.f32 0.0, %v817
  %v819 = vpop.f32.mrb[0].mxu0
  %v820 = vpop.f32.mrb[0].mxu0
  %821 = vdwg.mxu0
  %822 = vmatprep.subr.bf16.mxu0 %v294
  %823 = vmatpush1.bf16.msra.mxu0 %v293
  %824 = vmatprep.subr.bf16.mxu0 %v298
  %825 = vmatpush1.bf16.msra.mxu0 %v297
  %826 = vmatprep.subr.bf16.mxu0 %v302
  %827 = vmatpush1.bf16.msra.mxu0 %v301
  %828 = vmatprep.subr.bf16.mxu0 %v306
  %829 = vmatpush1.bf16.msra.mxu0 %v305
  %830 = vmatprep.subr.bf16.mxu0 %v310
  %831 = vmatpush1.bf16.msra.mxu0 %v309
  %832 = vmatprep.subr.bf16.mxu0 %v314
  %833 = vmatpush1.bf16.msra.mxu0 %v313
  %834 = vmatprep.subr.bf16.mxu0 %v318
  %835 = vmatpush1.bf16.msra.mxu0 %v317
  %836 = vmatprep.subr.bf16.mxu0 %v322
  %837 = vmatpush1.bf16.msra.mxu0 %v321
  %838 = vmatprep.subr.bf16.mxu0 %v326
  %839 = vmatpush1.bf16.msra.mxu0 %v325
  %840 = vmatprep.subr.bf16.mxu0 %v330
  %841 = vmatpush1.bf16.msra.mxu0 %v329
  %842 = vmatprep.subr.bf16.mxu0 %v334
  %843 = vmatpush1.bf16.msra.mxu0 %v333
  %844 = vmatprep.subr.bf16.mxu0 %v338
  %845 = vmatpush1.bf16.msra.mxu0 %v337
  %846 = vmatprep.subr.bf16.mxu0 %v342
  %847 = vmatpush1.bf16.msra.mxu0 %v341
  %848 = vmatprep.subr.bf16.mxu0 %v346
  %849 = vmatpush1.bf16.msra.mxu0 %v345
  %850 = vmatprep.subr.bf16.mxu0 %v350
  %851 = vmatpush1.bf16.msra.mxu0 %v349
  %852 = vmatprep.subr.bf16.mxu0 %v354
  %853 = vmatpush1.bf16.msra.mxu0 %v353
  %854 = vmatprep.mubr.bf16.mxu0 %v780
  %855 = vmatmul.mubr.bf16.gmra.mrb[0].mxu0 %v779
  %v856 = vpop.f32.mrb[0].mxu0
  %v857 = vadd.f32 0.0, %v856
  %v858 = vpop.f32.mrb[0].mxu0
  %v859 = vadd.f32 0.0, %v858
  %v860 = vpop.f32.mrb[0].mxu0
  %v861 = vpop.f32.mrb[0].mxu0
  %862 = vdwg.mxu0
  %v863 = vadd.f32 %v775, %v816
  %v864 = vadd.f32 %v776, %v818
  %v865 = vadd.f32 %v777, %v857
  %v866 = vadd.f32 %v778, %v859
  %v867 = vxor.u32 %v863, 2147483648
  %v868 = vxor.u32 %v864, 2147483648
  %v869 = vxor.u32 %v865, 2147483648
  %v870 = vmul.f32 %v867, 1.442695
  %v871 = vpow.pop %v870
  %v872 = vmul.f32 %v868, 1.442695
  %v873 = vpow.pop %v872
  %v874 = vmul.f32 %v869, 1.442695
  %v875 = vpow.pop %v874
  %v876 = vadd.f32 %v871, 1.0
  %v877 = vadd.f32 %v873, 1.0
  %v878 = vadd.f32 %v875, 1.0
  %v879 = vrcp.pop %v876
  %v880 = vmul.f32 1.0, %v879
  %v881 = vrcp.pop %v877
  %v882 = vmul.f32 1.0, %v881
  %v883 = vrcp.pop %v878
  %v884 = vmul.f32 1.0, %v883
  %v885 = vtanh.pop %v866
  %v886 = vmul.f32 %v882, %v767
  %v887 = vmul.f32 %v880, %v885
  %v888 = vadd.f32 %v886, %v887
  %v889 = vtanh.pop %v888
  %v890 = vmul.f32 %v884, %v889
  %v891 = vmul.f32 %v890, %v29
  %v892 = vmul.f32 %v890, %v30
  %v893 = vadd.f32 %v772, %v890
  %v894 = vmax.f32 %v773, %v890
  %s895 = scalar_lea.vmem %s0, 128
  %v896 = vld [vmem:[%s895] sm:$0xff]
  %v897 = vld [vmem:[%s895 + $0x8] sm:$0xff]
  %v898 = vld [vmem:[%s895 + $0x10] sm:$0xff]
  %v899 = vld [vmem:[%s895 + $0x18] sm:$0xff]
  %v900 = vpack.c.bf16 %v891, %v891
  %v901 = vpack.c.bf16 %v892, %v892
  %902 = vmatprep.subr.bf16.mxu0 %v292
  %903 = vmatpush1.bf16.msra.mxu0 %v291
  %904 = vmatprep.subr.bf16.mxu0 %v296
  %905 = vmatpush1.bf16.msra.mxu0 %v295
  %906 = vmatprep.subr.bf16.mxu0 %v300
  %907 = vmatpush1.bf16.msra.mxu0 %v299
  %908 = vmatprep.subr.bf16.mxu0 %v304
  %909 = vmatpush1.bf16.msra.mxu0 %v303
  %910 = vmatprep.subr.bf16.mxu0 %v308
  %911 = vmatpush1.bf16.msra.mxu0 %v307
  %912 = vmatprep.subr.bf16.mxu0 %v312
  %913 = vmatpush1.bf16.msra.mxu0 %v311
  %914 = vmatprep.subr.bf16.mxu0 %v316
  %915 = vmatpush1.bf16.msra.mxu0 %v315
  %916 = vmatprep.subr.bf16.mxu0 %v320
  %917 = vmatpush1.bf16.msra.mxu0 %v319
  %918 = vmatprep.subr.bf16.mxu0 %v324
  %919 = vmatpush1.bf16.msra.mxu0 %v323
  %920 = vmatprep.subr.bf16.mxu0 %v328
  %921 = vmatpush1.bf16.msra.mxu0 %v327
  %922 = vmatprep.subr.bf16.mxu0 %v332
  %923 = vmatpush1.bf16.msra.mxu0 %v331
  %924 = vmatprep.subr.bf16.mxu0 %v336
  %925 = vmatpush1.bf16.msra.mxu0 %v335
  %926 = vmatprep.subr.bf16.mxu0 %v340
  %927 = vmatpush1.bf16.msra.mxu0 %v339
  %928 = vmatprep.subr.bf16.mxu0 %v344
  %929 = vmatpush1.bf16.msra.mxu0 %v343
  %930 = vmatprep.subr.bf16.mxu0 %v348
  %931 = vmatpush1.bf16.msra.mxu0 %v347
  %932 = vmatprep.subr.bf16.mxu0 %v352
  %933 = vmatpush1.bf16.msra.mxu0 %v351
  %934 = vmatprep.mubr.bf16.mxu0 %v901
  %935 = vmatmul.mubr.bf16.gmra.mrb[0].mxu0 %v900
  %v936 = vpop.f32.mrb[0].mxu0
  %v937 = vadd.f32 0.0, %v936
  %v938 = vpop.f32.mrb[0].mxu0
  %v939 = vadd.f32 0.0, %v938
  %v940 = vpop.f32.mrb[0].mxu0
  %v941 = vpop.f32.mrb[0].mxu0
  %942 = vdwg.mxu0
  %943 = vmatprep.subr.bf16.mxu0 %v294
  %944 = vmatpush1.bf16.msra.mxu0 %v293
  %945 = vmatprep.subr.bf16.mxu0 %v298
  %946 = vmatpush1.bf16.msra.mxu0 %v297
  %947 = vmatprep.subr.bf16.mxu0 %v302
  %948 = vmatpush1.bf16.msra.mxu0 %v301
  %949 = vmatprep.subr.bf16.mxu0 %v306
  %950 = vmatpush1.bf16.msra.mxu0 %v305
  %951 = vmatprep.subr.bf16.mxu0 %v310
  %952 = vmatpush1.bf16.msra.mxu0 %v309
  %953 = vmatprep.subr.bf16.mxu0 %v314
  %954 = vmatpush1.bf16.msra.mxu0 %v313
  %955 = vmatprep.subr.bf16.mxu0 %v318
  %956 = vmatpush1.bf16.msra.mxu0 %v317
  %957 = vmatprep.subr.bf16.mxu0 %v322
  %958 = vmatpush1.bf16.msra.mxu0 %v321
  %959 = vmatprep.subr.bf16.mxu0 %v326
  %960 = vmatpush1.bf16.msra.mxu0 %v325
  %961 = vmatprep.subr.bf16.mxu0 %v330
  %962 = vmatpush1.bf16.msra.mxu0 %v329
  %963 = vmatprep.subr.bf16.mxu0 %v334
  %964 = vmatpush1.bf16.msra.mxu0 %v333
  %965 = vmatprep.subr.bf16.mxu0 %v338
  %966 = vmatpush1.bf16.msra.mxu0 %v337
  %967 = vmatprep.subr.bf16.mxu0 %v342
  %968 = vmatpush1.bf16.msra.mxu0 %v341
  %969 = vmatprep.subr.bf16.mxu0 %v346
  %970 = vmatpush1.bf16.msra.mxu0 %v345
  %971 = vmatprep.subr.bf16.mxu0 %v350
  %972 = vmatpush1.bf16.msra.mxu0 %v349
  %973 = vmatprep.subr.bf16.mxu0 %v354
  %974 = vmatpush1.bf16.msra.mxu0 %v353
  %975 = vmatprep.mubr.bf16.mxu0 %v901
  %976 = vmatmul.mubr.bf16.gmra.mrb[0].mxu0 %v900
  %v977 = vpop.f32.mrb[0].mxu0
  %v978 = vadd.f32 0.0, %v977
  %v979 = vpop.f32.mrb[0].mxu0
  %v980 = vadd.f32 0.0, %v979
  %v981 = vpop.f32.mrb[0].mxu0
  %v982 = vpop.f32.mrb[0].mxu0
  %983 = vdwg.mxu0
  %v984 = vadd.f32 %v896, %v937
  %v985 = vadd.f32 %v897, %v939
  %v986 = vadd.f32 %v898, %v978
  %v987 = vadd.f32 %v899, %v980
  %v988 = vxor.u32 %v984, 2147483648
  %v989 = vxor.u32 %v985, 2147483648
  %v990 = vxor.u32 %v986, 2147483648
  %v991 = vmul.f32 %v988, 1.442695
  %v992 = vpow.pop %v991
  %v993 = vmul.f32 %v989, 1.442695
  %v994 = vpow.pop %v993
  %v995 = vmul.f32 %v990, 1.442695
  %v996 = vpow.pop %v995
  %v997 = vadd.f32 %v992, 1.0
  %v998 = vadd.f32 %v994, 1.0
  %v999 = vadd.f32 %v996, 1.0
  %v1000 = vrcp.pop %v997
  %v1001 = vmul.f32 1.0, %v1000
  %v1002 = vrcp.pop %v998
  %v1003 = vmul.f32 1.0, %v1002
  %v1004 = vrcp.pop %v999
  %v1005 = vmul.f32 1.0, %v1004
  %v1006 = vtanh.pop %v987
  %v1007 = vmul.f32 %v1003, %v888
  %v1008 = vmul.f32 %v1001, %v1006
  %v1009 = vadd.f32 %v1007, %v1008
  %v1010 = vtanh.pop %v1009
  %v1011 = vmul.f32 %v1005, %v1010
  %v1012 = vmul.f32 %v1011, %v29
  %v1013 = vmul.f32 %v1011, %v30
  %v1014 = vadd.f32 %v893, %v1011
  %v1015 = vmax.f32 %v894, %v1011
  %s1016 = scalar_lea.vmem %s0, 160
  %v1017 = vld [vmem:[%s1016] sm:$0xff]
  %v1018 = vld [vmem:[%s1016 + $0x8] sm:$0xff]
  %v1019 = vld [vmem:[%s1016 + $0x10] sm:$0xff]
  %v1020 = vld [vmem:[%s1016 + $0x18] sm:$0xff]
  %v1021 = vpack.c.bf16 %v1012, %v1012
  %v1022 = vpack.c.bf16 %v1013, %v1013
  %1023 = vmatprep.subr.bf16.mxu0 %v292
  %1024 = vmatpush1.bf16.msra.mxu0 %v291
  %1025 = vmatprep.subr.bf16.mxu0 %v296
  %1026 = vmatpush1.bf16.msra.mxu0 %v295
  %1027 = vmatprep.subr.bf16.mxu0 %v300
  %1028 = vmatpush1.bf16.msra.mxu0 %v299
  %1029 = vmatprep.subr.bf16.mxu0 %v304
  %1030 = vmatpush1.bf16.msra.mxu0 %v303
  %1031 = vmatprep.subr.bf16.mxu0 %v308
  %1032 = vmatpush1.bf16.msra.mxu0 %v307
  %1033 = vmatprep.subr.bf16.mxu0 %v312
  %1034 = vmatpush1.bf16.msra.mxu0 %v311
  %1035 = vmatprep.subr.bf16.mxu0 %v316
  %1036 = vmatpush1.bf16.msra.mxu0 %v315
  %1037 = vmatprep.subr.bf16.mxu0 %v320
  %1038 = vmatpush1.bf16.msra.mxu0 %v319
  %1039 = vmatprep.subr.bf16.mxu0 %v324
  %1040 = vmatpush1.bf16.msra.mxu0 %v323
  %1041 = vmatprep.subr.bf16.mxu0 %v328
  %1042 = vmatpush1.bf16.msra.mxu0 %v327
  %1043 = vmatprep.subr.bf16.mxu0 %v332
  %1044 = vmatpush1.bf16.msra.mxu0 %v331
  %1045 = vmatprep.subr.bf16.mxu0 %v336
  %1046 = vmatpush1.bf16.msra.mxu0 %v335
  %1047 = vmatprep.subr.bf16.mxu0 %v340
  %1048 = vmatpush1.bf16.msra.mxu0 %v339
  %1049 = vmatprep.subr.bf16.mxu0 %v344
  %1050 = vmatpush1.bf16.msra.mxu0 %v343
  %1051 = vmatprep.subr.bf16.mxu0 %v348
  %1052 = vmatpush1.bf16.msra.mxu0 %v347
  %1053 = vmatprep.subr.bf16.mxu0 %v352
  %1054 = vmatpush1.bf16.msra.mxu0 %v351
  %1055 = vmatprep.mubr.bf16.mxu0 %v1022
  %1056 = vmatmul.mubr.bf16.gmra.mrb[0].mxu0 %v1021
  %v1057 = vpop.f32.mrb[0].mxu0
  %v1058 = vadd.f32 0.0, %v1057
  %v1059 = vpop.f32.mrb[0].mxu0
  %v1060 = vadd.f32 0.0, %v1059
  %v1061 = vpop.f32.mrb[0].mxu0
  %v1062 = vpop.f32.mrb[0].mxu0
  %1063 = vdwg.mxu0
  %1064 = vmatprep.subr.bf16.mxu0 %v294
  %1065 = vmatpush1.bf16.msra.mxu0 %v293
  %1066 = vmatprep.subr.bf16.mxu0 %v298
  %1067 = vmatpush1.bf16.msra.mxu0 %v297
  %1068 = vmatprep.subr.bf16.mxu0 %v302
  %1069 = vmatpush1.bf16.msra.mxu0 %v301
  %1070 = vmatprep.subr.bf16.mxu0 %v306
  %1071 = vmatpush1.bf16.msra.mxu0 %v305
  %1072 = vmatprep.subr.bf16.mxu0 %v310
  %1073 = vmatpush1.bf16.msra.mxu0 %v309
  %1074 = vmatprep.subr.bf16.mxu0 %v314
  %1075 = vmatpush1.bf16.msra.mxu0 %v313
  %1076 = vmatprep.subr.bf16.mxu0 %v318
  %1077 = vmatpush1.bf16.msra.mxu0 %v317
  %1078 = vmatprep.subr.bf16.mxu0 %v322
  %1079 = vmatpush1.bf16.msra.mxu0 %v321
  %1080 = vmatprep.subr.bf16.mxu0 %v326
  %1081 = vmatpush1.bf16.msra.mxu0 %v325
  %1082 = vmatprep.subr.bf16.mxu0 %v330
  %1083 = vmatpush1.bf16.msra.mxu0 %v329
  %1084 = vmatprep.subr.bf16.mxu0 %v334
  %1085 = vmatpush1.bf16.msra.mxu0 %v333
  %1086 = vmatprep.subr.bf16.mxu0 %v338
  %1087 = vmatpush1.bf16.msra.mxu0 %v337
  %1088 = vmatprep.subr.bf16.mxu0 %v342
  %1089 = vmatpush1.bf16.msra.mxu0 %v341
  %1090 = vmatprep.subr.bf16.mxu0 %v346
  %1091 = vmatpush1.bf16.msra.mxu0 %v345
  %1092 = vmatprep.subr.bf16.mxu0 %v350
  %1093 = vmatpush1.bf16.msra.mxu0 %v349
  %1094 = vmatprep.subr.bf16.mxu0 %v354
  %1095 = vmatpush1.bf16.msra.mxu0 %v353
  %1096 = vmatprep.mubr.bf16.mxu0 %v1022
  %1097 = vmatmul.mubr.bf16.gmra.mrb[0].mxu0 %v1021
  %v1098 = vpop.f32.mrb[0].mxu0
  %v1099 = vadd.f32 0.0, %v1098
  %v1100 = vpop.f32.mrb[0].mxu0
  %v1101 = vadd.f32 0.0, %v1100
  %v1102 = vpop.f32.mrb[0].mxu0
  %v1103 = vpop.f32.mrb[0].mxu0
  %1104 = vdwg.mxu0
  %v1105 = vadd.f32 %v1017, %v1058
  %v1106 = vadd.f32 %v1018, %v1060
  %v1107 = vadd.f32 %v1019, %v1099
  %v1108 = vadd.f32 %v1020, %v1101
  %v1109 = vxor.u32 %v1105, 2147483648
  %v1110 = vxor.u32 %v1106, 2147483648
  %v1111 = vxor.u32 %v1107, 2147483648
  %v1112 = vmul.f32 %v1109, 1.442695
  %v1113 = vpow.pop %v1112
  %v1114 = vmul.f32 %v1110, 1.442695
  %v1115 = vpow.pop %v1114
  %v1116 = vmul.f32 %v1111, 1.442695
  %v1117 = vpow.pop %v1116
  %v1118 = vadd.f32 %v1113, 1.0
  %v1119 = vadd.f32 %v1115, 1.0
  %v1120 = vadd.f32 %v1117, 1.0
  %v1121 = vrcp.pop %v1118
  %v1122 = vmul.f32 1.0, %v1121
  %v1123 = vrcp.pop %v1119
  %v1124 = vmul.f32 1.0, %v1123
  %v1125 = vrcp.pop %v1120
  %v1126 = vmul.f32 1.0, %v1125
  %v1127 = vtanh.pop %v1108
  %v1128 = vmul.f32 %v1124, %v1009
  %v1129 = vmul.f32 %v1122, %v1127
  %v1130 = vadd.f32 %v1128, %v1129
  %v1131 = vtanh.pop %v1130
  %v1132 = vmul.f32 %v1126, %v1131
  %v1133 = vmul.f32 %v1132, %v29
  %v1134 = vmul.f32 %v1132, %v30
  %v1135 = vadd.f32 %v1014, %v1132
  %v1136 = vmax.f32 %v1015, %v1132
  %s1137 = scalar_lea.vmem %s0, 192
  %v1138 = vld [vmem:[%s1137] sm:$0xff]
  %v1139 = vld [vmem:[%s1137 + $0x8] sm:$0xff]
  %v1140 = vld [vmem:[%s1137 + $0x10] sm:$0xff]
  %v1141 = vld [vmem:[%s1137 + $0x18] sm:$0xff]
  %v1142 = vpack.c.bf16 %v1133, %v1133
  %v1143 = vpack.c.bf16 %v1134, %v1134
  %1144 = vmatprep.subr.bf16.mxu0 %v292
  %1145 = vmatpush1.bf16.msra.mxu0 %v291
  %1146 = vmatprep.subr.bf16.mxu0 %v296
  %1147 = vmatpush1.bf16.msra.mxu0 %v295
  %1148 = vmatprep.subr.bf16.mxu0 %v300
  %1149 = vmatpush1.bf16.msra.mxu0 %v299
  %1150 = vmatprep.subr.bf16.mxu0 %v304
  %1151 = vmatpush1.bf16.msra.mxu0 %v303
  %1152 = vmatprep.subr.bf16.mxu0 %v308
  %1153 = vmatpush1.bf16.msra.mxu0 %v307
  %1154 = vmatprep.subr.bf16.mxu0 %v312
  %1155 = vmatpush1.bf16.msra.mxu0 %v311
  %1156 = vmatprep.subr.bf16.mxu0 %v316
  %1157 = vmatpush1.bf16.msra.mxu0 %v315
  %1158 = vmatprep.subr.bf16.mxu0 %v320
  %1159 = vmatpush1.bf16.msra.mxu0 %v319
  %1160 = vmatprep.subr.bf16.mxu0 %v324
  %1161 = vmatpush1.bf16.msra.mxu0 %v323
  %1162 = vmatprep.subr.bf16.mxu0 %v328
  %1163 = vmatpush1.bf16.msra.mxu0 %v327
  %1164 = vmatprep.subr.bf16.mxu0 %v332
  %1165 = vmatpush1.bf16.msra.mxu0 %v331
  %1166 = vmatprep.subr.bf16.mxu0 %v336
  %1167 = vmatpush1.bf16.msra.mxu0 %v335
  %1168 = vmatprep.subr.bf16.mxu0 %v340
  %1169 = vmatpush1.bf16.msra.mxu0 %v339
  %1170 = vmatprep.subr.bf16.mxu0 %v344
  %1171 = vmatpush1.bf16.msra.mxu0 %v343
  %1172 = vmatprep.subr.bf16.mxu0 %v348
  %1173 = vmatpush1.bf16.msra.mxu0 %v347
  %1174 = vmatprep.subr.bf16.mxu0 %v352
  %1175 = vmatpush1.bf16.msra.mxu0 %v351
  %1176 = vmatprep.mubr.bf16.mxu0 %v1143
  %1177 = vmatmul.mubr.bf16.gmra.mrb[0].mxu0 %v1142
  %v1178 = vpop.f32.mrb[0].mxu0
  %v1179 = vadd.f32 0.0, %v1178
  %v1180 = vpop.f32.mrb[0].mxu0
  %v1181 = vadd.f32 0.0, %v1180
  %v1182 = vpop.f32.mrb[0].mxu0
  %v1183 = vpop.f32.mrb[0].mxu0
  %1184 = vdwg.mxu0
  %1185 = vmatprep.subr.bf16.mxu0 %v294
  %1186 = vmatpush1.bf16.msra.mxu0 %v293
  %1187 = vmatprep.subr.bf16.mxu0 %v298
  %1188 = vmatpush1.bf16.msra.mxu0 %v297
  %1189 = vmatprep.subr.bf16.mxu0 %v302
  %1190 = vmatpush1.bf16.msra.mxu0 %v301
  %1191 = vmatprep.subr.bf16.mxu0 %v306
  %1192 = vmatpush1.bf16.msra.mxu0 %v305
  %1193 = vmatprep.subr.bf16.mxu0 %v310
  %1194 = vmatpush1.bf16.msra.mxu0 %v309
  %1195 = vmatprep.subr.bf16.mxu0 %v314
  %1196 = vmatpush1.bf16.msra.mxu0 %v313
  %1197 = vmatprep.subr.bf16.mxu0 %v318
  %1198 = vmatpush1.bf16.msra.mxu0 %v317
  %1199 = vmatprep.subr.bf16.mxu0 %v322
  %1200 = vmatpush1.bf16.msra.mxu0 %v321
  %1201 = vmatprep.subr.bf16.mxu0 %v326
  %1202 = vmatpush1.bf16.msra.mxu0 %v325
  %1203 = vmatprep.subr.bf16.mxu0 %v330
  %1204 = vmatpush1.bf16.msra.mxu0 %v329
  %1205 = vmatprep.subr.bf16.mxu0 %v334
  %1206 = vmatpush1.bf16.msra.mxu0 %v333
  %1207 = vmatprep.subr.bf16.mxu0 %v338
  %1208 = vmatpush1.bf16.msra.mxu0 %v337
  %1209 = vmatprep.subr.bf16.mxu0 %v342
  %1210 = vmatpush1.bf16.msra.mxu0 %v341
  %1211 = vmatprep.subr.bf16.mxu0 %v346
  %1212 = vmatpush1.bf16.msra.mxu0 %v345
  %1213 = vmatprep.subr.bf16.mxu0 %v350
  %1214 = vmatpush1.bf16.msra.mxu0 %v349
  %1215 = vmatprep.subr.bf16.mxu0 %v354
  %1216 = vmatpush1.bf16.msra.mxu0 %v353
  %1217 = vmatprep.mubr.bf16.mxu0 %v1143
  %1218 = vmatmul.mubr.bf16.gmra.mrb[0].mxu0 %v1142
  %v1219 = vpop.f32.mrb[0].mxu0
  %v1220 = vadd.f32 0.0, %v1219
  %v1221 = vpop.f32.mrb[0].mxu0
  %v1222 = vadd.f32 0.0, %v1221
  %v1223 = vpop.f32.mrb[0].mxu0
  %v1224 = vpop.f32.mrb[0].mxu0
  %1225 = vdwg.mxu0
  %v1226 = vadd.f32 %v1138, %v1179
  %v1227 = vadd.f32 %v1139, %v1181
  %v1228 = vadd.f32 %v1140, %v1220
  %v1229 = vadd.f32 %v1141, %v1222
  %v1230 = vxor.u32 %v1226, 2147483648
  %v1231 = vxor.u32 %v1227, 2147483648
  %v1232 = vxor.u32 %v1228, 2147483648
  %v1233 = vmul.f32 %v1230, 1.442695
  %v1234 = vpow.pop %v1233
  %v1235 = vmul.f32 %v1231, 1.442695
  %v1236 = vpow.pop %v1235
  %v1237 = vmul.f32 %v1232, 1.442695
  %v1238 = vpow.pop %v1237
  %v1239 = vadd.f32 %v1234, 1.0
  %v1240 = vadd.f32 %v1236, 1.0
  %v1241 = vadd.f32 %v1238, 1.0
  %v1242 = vrcp.pop %v1239
  %v1243 = vmul.f32 1.0, %v1242
  %v1244 = vrcp.pop %v1240
  %v1245 = vmul.f32 1.0, %v1244
  %v1246 = vrcp.pop %v1241
  %v1247 = vmul.f32 1.0, %v1246
  %v1248 = vtanh.pop %v1229
  %v1249 = vmul.f32 %v1245, %v1130
  %v1250 = vmul.f32 %v1243, %v1248
  %v1251 = vadd.f32 %v1249, %v1250
  %v1252 = vtanh.pop %v1251
  %v1253 = vmul.f32 %v1247, %v1252
  %v1254 = vmul.f32 %v1253, %v29
  %v1255 = vmul.f32 %v1253, %v30
  %v1256 = vadd.f32 %v1135, %v1253
  %v1257 = vmax.f32 %v1136, %v1253
  %s1258 = scalar_lea.vmem %s0, 224
  %v1259 = vld [vmem:[%s1258] sm:$0xff]
  %v1260 = vld [vmem:[%s1258 + $0x8] sm:$0xff]
  %v1261 = vld [vmem:[%s1258 + $0x10] sm:$0xff]
  %v1262 = vld [vmem:[%s1258 + $0x18] sm:$0xff]
  %v1263 = vpack.c.bf16 %v1254, %v1254
  %v1264 = vpack.c.bf16 %v1255, %v1255
  %1265 = vmatprep.subr.bf16.mxu0 %v292
  %1266 = vmatpush1.bf16.msra.mxu0 %v291
  %1267 = vmatprep.subr.bf16.mxu0 %v296
  %1268 = vmatpush1.bf16.msra.mxu0 %v295
  %1269 = vmatprep.subr.bf16.mxu0 %v300
  %1270 = vmatpush1.bf16.msra.mxu0 %v299
  %1271 = vmatprep.subr.bf16.mxu0 %v304
  %1272 = vmatpush1.bf16.msra.mxu0 %v303
  %1273 = vmatprep.subr.bf16.mxu0 %v308
  %1274 = vmatpush1.bf16.msra.mxu0 %v307
  %1275 = vmatprep.subr.bf16.mxu0 %v312
  %1276 = vmatpush1.bf16.msra.mxu0 %v311
  %1277 = vmatprep.subr.bf16.mxu0 %v316
  %1278 = vmatpush1.bf16.msra.mxu0 %v315
  %1279 = vmatprep.subr.bf16.mxu0 %v320
  %1280 = vmatpush1.bf16.msra.mxu0 %v319
  %1281 = vmatprep.subr.bf16.mxu0 %v324
  %1282 = vmatpush1.bf16.msra.mxu0 %v323
  %1283 = vmatprep.subr.bf16.mxu0 %v328
  %1284 = vmatpush1.bf16.msra.mxu0 %v327
  %1285 = vmatprep.subr.bf16.mxu0 %v332
  %1286 = vmatpush1.bf16.msra.mxu0 %v331
  %1287 = vmatprep.subr.bf16.mxu0 %v336
  %1288 = vmatpush1.bf16.msra.mxu0 %v335
  %1289 = vmatprep.subr.bf16.mxu0 %v340
  %1290 = vmatpush1.bf16.msra.mxu0 %v339
  %1291 = vmatprep.subr.bf16.mxu0 %v344
  %1292 = vmatpush1.bf16.msra.mxu0 %v343
  %1293 = vmatprep.subr.bf16.mxu0 %v348
  %1294 = vmatpush1.bf16.msra.mxu0 %v347
  %1295 = vmatprep.subr.bf16.mxu0 %v352
  %1296 = vmatpush1.bf16.msra.mxu0 %v351
  %1297 = vmatprep.mubr.bf16.mxu0 %v1264
  %1298 = vmatmul.mubr.bf16.gmra.mrb[0].mxu0 %v1263
  %v1299 = vpop.f32.mrb[0].mxu0
  %v1300 = vadd.f32 0.0, %v1299
  %v1301 = vpop.f32.mrb[0].mxu0
  %v1302 = vadd.f32 0.0, %v1301
  %v1303 = vpop.f32.mrb[0].mxu0
  %v1304 = vpop.f32.mrb[0].mxu0
  %1305 = vdwg.mxu0
  %1306 = vmatprep.subr.bf16.mxu0 %v294
  %1307 = vmatpush1.bf16.msra.mxu0 %v293
  %1308 = vmatprep.subr.bf16.mxu0 %v298
  %1309 = vmatpush1.bf16.msra.mxu0 %v297
  %1310 = vmatprep.subr.bf16.mxu0 %v302
  %1311 = vmatpush1.bf16.msra.mxu0 %v301
  %1312 = vmatprep.subr.bf16.mxu0 %v306
  %1313 = vmatpush1.bf16.msra.mxu0 %v305
  %1314 = vmatprep.subr.bf16.mxu0 %v310
  %1315 = vmatpush1.bf16.msra.mxu0 %v309
  %1316 = vmatprep.subr.bf16.mxu0 %v314
  %1317 = vmatpush1.bf16.msra.mxu0 %v313
  %1318 = vmatprep.subr.bf16.mxu0 %v318
  %1319 = vmatpush1.bf16.msra.mxu0 %v317
  %1320 = vmatprep.subr.bf16.mxu0 %v322
  %1321 = vmatpush1.bf16.msra.mxu0 %v321
  %1322 = vmatprep.subr.bf16.mxu0 %v326
  %1323 = vmatpush1.bf16.msra.mxu0 %v325
  %1324 = vmatprep.subr.bf16.mxu0 %v330
  %1325 = vmatpush1.bf16.msra.mxu0 %v329
  %1326 = vmatprep.subr.bf16.mxu0 %v334
  %1327 = vmatpush1.bf16.msra.mxu0 %v333
  %1328 = vmatprep.subr.bf16.mxu0 %v338
  %1329 = vmatpush1.bf16.msra.mxu0 %v337
  %1330 = vmatprep.subr.bf16.mxu0 %v342
  %1331 = vmatpush1.bf16.msra.mxu0 %v341
  %1332 = vmatprep.subr.bf16.mxu0 %v346
  %1333 = vmatpush1.bf16.msra.mxu0 %v345
  %1334 = vmatprep.subr.bf16.mxu0 %v350
  %1335 = vmatpush1.bf16.msra.mxu0 %v349
  %1336 = vmatprep.subr.bf16.mxu0 %v354
  %1337 = vmatpush1.bf16.msra.mxu0 %v353
  %1338 = vmatprep.mubr.bf16.mxu0 %v1264
  %1339 = vmatmul.mubr.bf16.gmra.mrb[0].mxu0 %v1263
  %v1340 = vpop.f32.mrb[0].mxu0
  %v1341 = vadd.f32 0.0, %v1340
  %v1342 = vpop.f32.mrb[0].mxu0
  %v1343 = vadd.f32 0.0, %v1342
  %v1344 = vpop.f32.mrb[0].mxu0
  %v1345 = vpop.f32.mrb[0].mxu0
  %1346 = vdwg.mxu0
  %v1347 = vadd.f32 %v1259, %v1300
  %v1348 = vadd.f32 %v1260, %v1302
  %v1349 = vadd.f32 %v1261, %v1341
  %v1350 = vadd.f32 %v1262, %v1343
  %v1351 = vxor.u32 %v1347, 2147483648
  %v1352 = vxor.u32 %v1348, 2147483648
  %v1353 = vxor.u32 %v1349, 2147483648
  %v1354 = vmul.f32 %v1351, 1.442695
  %v1355 = vpow.pop %v1354
  %v1356 = vmul.f32 %v1352, 1.442695
  %v1357 = vpow.pop %v1356
  %v1358 = vmul.f32 %v1353, 1.442695
  %v1359 = vpow.pop %v1358
  %v1360 = vadd.f32 %v1355, 1.0
  %v1361 = vadd.f32 %v1357, 1.0
  %v1362 = vadd.f32 %v1359, 1.0
  %v1363 = vrcp.pop %v1360
  %v1364 = vmul.f32 1.0, %v1363
  %v1365 = vrcp.pop %v1361
  %v1366 = vmul.f32 1.0, %v1365
  %v1367 = vrcp.pop %v1362
  %v1368 = vmul.f32 1.0, %v1367
  %v1369 = vtanh.pop %v1350
  %v1370 = vmul.f32 %v1366, %v1251
  %v1371 = vmul.f32 %v1364, %v1369
  %v1372 = vadd.f32 %v1370, %v1371
  %v1373 = vtanh.pop %v1372
  %v1374 = vmul.f32 %v1368, %v1373
  %v1375 = vadd.f32 %v1256, %v1374
  %v1376 = vmax.f32 %v1257, %v1374
  %v1377 = vmul.f32 %v1375, 0.125
  %v1378 = vld [vmem:[%s2] sm:$0xff]
  %v1379 = vld [vmem:[%s2 + $0x8] sm:$0xff]
  %v1380 = vmul.f32 %v1377, %v1378
  %v1381 = vmul.f32 %v1376, %v1379
  %v1382 = vadd.f32 %v1380, %v1381
  %1383 = vadd.xlane.f32.xlu0 %v1382
  %v1384 = vpop.xlane.xlu0 %1383
  %vm1385 = vcmask 7168
  %1386 = vst.msk [vmem:[%s3] sm:$0xff] %vm1385, %v1384
  // Predicated region
  $region14: #{lstm_forward.1} parent=0 // pred_check
    _
  $region15: #{lstm_forward.1} parent=0 // pred_check_branch
    %1388 = sbr.rel (0) target = $region17
  $region16: #{lstm_forward.1} parent=0 // pred_region
    _
  $region17: #{lstm_forward.1} parent=0 // pred_fallthru
    _
  // Predicated region
  $region18: #{lstm_forward.1} parent=0 // pred_check
    _
  $region19: #{lstm_forward.1} parent=0 // pred_check_branch
    %1390 = sbr.rel (0) target = $region21
  $region20: #{lstm_forward.1} parent=0 // pred_region
    _
  $region21: #{lstm_forward.1} parent=0 // pred_fallthru
    _

</llo_original>
